<compile_context>
chip_gen: v5e
topology: v5e:2x2
jax: 0.10.0
libtpu: 0.0.40
codegen_flags: <defaults>
</compile_context>

<pallas_src>
import functools
import math

import jax
import jax.numpy as jnp
import numpy as np
from jax import lax
from jax.experimental import pallas as pl
from jax.experimental.pallas import tpu as pltpu


def _layer_norm(y, gamma, beta, eps=1e-5):
    mu = jnp.mean(y, axis=-1, keepdims=True)
    var = jnp.mean((y - mu) ** 2, axis=-1, keepdims=True)
    return (y - mu) * lax.rsqrt(var + eps) * gamma + beta


def encoder_kernel(x_ref, wqkv_ref, bqkv_ref, wo_ref, bo_ref, g_ref, be_ref,
                   w12_ref, b12_ref, o_ref, *, H, N, d_model, dk):
    x0 = x_ref[0].astype(jnp.float32)                       # (S, D)
    scale = 1.0 / math.sqrt(d_model / H)

    # Hoist loop-invariant weights out of the layer loop (they stay in vregs).
    wqkv = wqkv_ref[...]                                    # (D, 3*dk)
    bqkv = bqkv_ref[...]                                    # (1, 3*dk)
    wo = wo_ref[...]                                        # (dk, D) folded
    bo = bo_ref[...]                                        # (1, D)
    gamma = g_ref[...]                                      # (1, D)
    beta = be_ref[...]                                      # (1, D)
    w12 = w12_ref[...]                                      # (D, D) = W1 @ W2
    b12 = b12_ref[...]                                      # (1, D)

    def one_layer(_, x):
        # ---- Multi-head attention (all H heads identical, see header) ----
        qkv = jnp.dot(x, wqkv, preferred_element_type=jnp.float32) + bqkv
        q = qkv[:, :dk]
        k = qkv[:, dk:2 * dk]
        v = qkv[:, 2 * dk:]
        # q @ k^T without an explicit transpose (contract the dk axis).
        qk = lax.dot_general(q, k, (((1,), (1,)), ((), ())),
                             preferred_element_type=jnp.float32) * scale  # (S, S)
        # nn.Softmax(dim=1) on (B, S, S)  ->  softmax over the *query* axis.
        m = jnp.max(qk, axis=0, keepdims=True)
        e = jnp.exp(qk - m)
        attn = e * pl.reciprocal(jnp.sum(e, axis=0, keepdims=True), approx=True)
        av = jnp.dot(attn, v, preferred_element_type=jnp.float32)         # (S, dk)
        # concat([av]*H) @ Wo  ==  av @ Wo_folded  (folded in the wrapper).
        mha = jnp.dot(av, wo, preferred_element_type=jnp.float32) + bo    # (S, D)

        y = _layer_norm(mha + x, gamma, beta)
        # ---- Feed-forward: FF2(FF1(y)) with no ReLU == y @ (W1@W2) + b12 ----
        h2 = jnp.dot(y, w12, preferred_element_type=jnp.float32) + b12
        return _layer_norm(y + h2, gamma, beta)

    out = lax.fori_loop(0, N, one_layer, x0, unroll=True)   # N static -> unroll
    o_ref[0] = out.astype(o_ref.dtype)


def encoder_transformer_forward(x, params, *, H, N):
    B, S, D = x.shape
    dk = D // H

    # ---- Algebraic weight fusions (exact in real arithmetic) ----
    wqkv = jnp.concatenate([params["wq"], params["wk"], params["wv"]], axis=1)
    bqkv = jnp.concatenate([params["bq"], params["bk"], params["bv"]], axis=1)
    wo_folded = params["wo"].reshape(H, dk, D).sum(axis=0)          # (dk, D)
    w12 = params["w1"] @ params["w2"]                               # (D, D)
    b12 = params["b1"] @ params["w2"] + params["b2"]                # (1, D)

    fused = [wqkv, bqkv, wo_folded, params["bo"],
             params["ln_g"], params["ln_b"], w12, b12]

    def full_spec(shape):
        nd = len(shape)
        return pl.BlockSpec(shape, lambda b, _nd=nd: (0,) * _nd)

    in_specs = [pl.BlockSpec((1, S, D), lambda b: (b, 0, 0))]
    in_specs += [full_spec(w.shape) for w in fused]

    kernel = functools.partial(encoder_kernel, H=H, N=N, d_model=D, dk=dk)
    return pl.pallas_call(
        kernel,
        out_shape=jax.ShapeDtypeStruct((B, S, D), x.dtype),
        grid=(B,),
        in_specs=in_specs,
        out_specs=pl.BlockSpec((1, S, D), lambda b: (b, 0, 0)),
        compiler_params=pltpu.CompilerParams(
            # batch iterations are independent -> shard across TCs on v7x
            dimension_semantics=("parallel",)),
    )(x, *fused)


def init_params(key, d_model, H, d_ff):
    dk = d_model // H
    keys = jax.random.split(key, 6)

    def linear(k, fan_in, fan_out):
        bound = 1.0 / math.sqrt(fan_in)
        kw, kb = jax.random.split(k)
        w = jax.random.uniform(kw, (fan_in, fan_out), jnp.float32, -bound, bound)
        b = jax.random.uniform(kb, (1, fan_out), jnp.float32, -bound, bound)
        return w, b

    wq, bq = linear(keys[0], d_model, dk)
    wk, bk = linear(keys[1], d_model, dk)
    wv, bv = linear(keys[2], d_model, dk)
    wo, bo = linear(keys[3], d_model, d_model)
    w1, b1 = linear(keys[4], d_model, d_ff)
    w2, b2 = linear(keys[5], d_ff, d_model)
    return dict(wq=wq, bq=bq, wk=wk, bk=bk, wv=wv, bv=bv, wo=wo, bo=bo,
                ln_g=jnp.ones((1, d_model), jnp.float32),
                ln_b=jnp.zeros((1, d_model), jnp.float32),
                w1=w1, b1=b1, w2=w2, b2=b2)


def reference_forward(x, params, *, H, N):
    """Pure-JAX reference matching the PyTorch forward semantics (unfused)."""
    D = x.shape[-1]
    scale = 1.0 / math.sqrt(D / H)

    def ln(y):
        mu = y.mean(-1, keepdims=True)
        var = ((y - mu) ** 2).mean(-1, keepdims=True)
        return (y - mu) / jnp.sqrt(var + 1e-5) * params["ln_g"] + params["ln_b"]

    for _ in range(N):
        q = x @ params["wq"] + params["bq"]
        k = x @ params["wk"] + params["bk"]
        v = x @ params["wv"] + params["bv"]
        qk = jnp.einsum("bqd,bkd->bqk", q, k) * scale
        attn = jax.nn.softmax(qk, axis=1)                 # softmax over query dim
        av = jnp.einsum("bqk,bkd->bqd", attn, v)
        concat = jnp.concatenate([av] * H, axis=-1)
        mha = concat @ params["wo"] + params["bo"]
        y = ln(mha + x)
        h = (y @ params["w1"] + params["b1"]) @ params["w2"] + params["b2"]
        x = ln(y + h)
    return x


if __name__ == "__main__":
    # Small config consistent with encoder_transformer(vocab_size, seq_len,
    # H=8, N=4, d_model=512): batch=2, seq=8, d_model=64, H=8, N=4.
    # FF hidden kept at the module's hard-coded 2048.
    B, S, D, H, N, D_FF = 2, 8, 64, 8, 4, 2048

    key = jax.random.PRNGKey(0)
    k_x, k_p = jax.random.split(key)
    # TODO(synk): token/segment/positional embeddings are unused by the module's
    # forward (it consumes a pre-embedded float tensor like torch.rand(1,50,512)),
    # so they are not implemented here.
    x = jax.random.uniform(k_x, (B, S, D), jnp.float32)
    params = init_params(k_p, D, H, D_FF)

    out = encoder_transformer_forward(x, params, H=H, N=N)
    out = jax.block_until_ready(out)

    ref = jax.block_until_ready(reference_forward(x, params, H=H, N=N))
    np.testing.assert_allclose(np.asarray(out), np.asarray(ref),
                               rtol=2e-2, atol=2e-2)
    print("KERNEL_OK")
</pallas_src>

<mosaic_0001>
module attributes {stable_mosaic.version = 11 : i64} {
  func.func @encoder_kernel(%arg0: i32, %arg1: memref<1x8x64xf32, #tpu.memory_space<vmem>>, %arg2: memref<64x24xf32, #tpu.memory_space<vmem>>, %arg3: memref<1x24xf32, #tpu.memory_space<vmem>>, %arg4: memref<8x64xf32, #tpu.memory_space<vmem>>, %arg5: memref<1x64xf32, #tpu.memory_space<vmem>>, %arg6: memref<1x64xf32, #tpu.memory_space<vmem>>, %arg7: memref<1x64xf32, #tpu.memory_space<vmem>>, %arg8: memref<64x64xf32, #tpu.memory_space<vmem>>, %arg9: memref<1x64xf32, #tpu.memory_space<vmem>>, %arg10: memref<1x8x64xf32, #tpu.memory_space<vmem>>) attributes {dimension_semantics = [#tpu.dimension_semantics<parallel>], iteration_bounds = array<i64: 2>, scalar_prefetch = 0 : i64, scratch_operands = 0 : i64, tpu.core_type = #tpu.core_type<tc>, window_params = [{transform_indices = @transform_0, window_bounds = array<i64: 1, 8, 64>}, {pipeline_mode = #tpu.pipeline_mode<synchronous>, transform_indices = @transform_1, window_bounds = array<i64: 64, 24>}, {pipeline_mode = #tpu.pipeline_mode<synchronous>, transform_indices = @transform_2, window_bounds = array<i64: 1, 24>}, {pipeline_mode = #tpu.pipeline_mode<synchronous>, transform_indices = @transform_3, window_bounds = array<i64: 8, 64>}, {pipeline_mode = #tpu.pipeline_mode<synchronous>, transform_indices = @transform_4, window_bounds = array<i64: 1, 64>}, {pipeline_mode = #tpu.pipeline_mode<synchronous>, transform_indices = @transform_5, window_bounds = array<i64: 1, 64>}, {pipeline_mode = #tpu.pipeline_mode<synchronous>, transform_indices = @transform_6, window_bounds = array<i64: 1, 64>}, {pipeline_mode = #tpu.pipeline_mode<synchronous>, transform_indices = @transform_7, window_bounds = array<i64: 64, 64>}, {pipeline_mode = #tpu.pipeline_mode<synchronous>, transform_indices = @transform_8, window_bounds = array<i64: 1, 64>}, {transform_indices = @transform_9, window_bounds = array<i64: 1, 8, 64>}]} {
    %c0 = arith.constant 0 : index
    %c0_0 = arith.constant 0 : index
    %c0_1 = arith.constant 0 : index
    %0 = vector.load %arg1[%c0, %c0_0, %c0_1] : memref<1x8x64xf32, #tpu.memory_space<vmem>>, vector<1x8x64xf32>
    %1 = vector.shape_cast %0 : vector<1x8x64xf32> to vector<8x64xf32>
    %c0_2 = arith.constant 0 : index
    %c0_3 = arith.constant 0 : index
    %2 = vector.load %arg2[%c0_2, %c0_3] : memref<64x24xf32, #tpu.memory_space<vmem>>, vector<64x24xf32>
    %c0_4 = arith.constant 0 : index
    %c0_5 = arith.constant 0 : index
    %3 = vector.load %arg3[%c0_4, %c0_5] : memref<1x24xf32, #tpu.memory_space<vmem>>, vector<1x24xf32>
    %c0_6 = arith.constant 0 : index
    %c0_7 = arith.constant 0 : index
    %4 = vector.load %arg4[%c0_6, %c0_7] : memref<8x64xf32, #tpu.memory_space<vmem>>, vector<8x64xf32>
    %c0_8 = arith.constant 0 : index
    %c0_9 = arith.constant 0 : index
    %5 = vector.load %arg5[%c0_8, %c0_9] : memref<1x64xf32, #tpu.memory_space<vmem>>, vector<1x64xf32>
    %c0_10 = arith.constant 0 : index
    %c0_11 = arith.constant 0 : index
    %6 = vector.load %arg6[%c0_10, %c0_11] : memref<1x64xf32, #tpu.memory_space<vmem>>, vector<1x64xf32>
    %c0_12 = arith.constant 0 : index
    %c0_13 = arith.constant 0 : index
    %7 = vector.load %arg7[%c0_12, %c0_13] : memref<1x64xf32, #tpu.memory_space<vmem>>, vector<1x64xf32>
    %c0_14 = arith.constant 0 : index
    %c0_15 = arith.constant 0 : index
    %8 = vector.load %arg8[%c0_14, %c0_15] : memref<64x64xf32, #tpu.memory_space<vmem>>, vector<64x64xf32>
    %c0_16 = arith.constant 0 : index
    %c0_17 = arith.constant 0 : index
    %9 = vector.load %arg9[%c0_16, %c0_17] : memref<1x64xf32, #tpu.memory_space<vmem>>, vector<1x64xf32>
    %c0_i32 = arith.constant 0 : i32
    %cst = arith.constant dense<0.000000e+00> : vector<8x24xf32>
    %10 = tpu.matmul %1, %2, %cst {dimension_numbers = #tpu.dot_dimension_numbers<[1], [0], [0], [1], [0, 0, 1, 1], [], []>} : vector<8x64xf32>, vector<64x24xf32>, vector<8x24xf32> -> vector<8x24xf32>
    %11 = vector.broadcast %3 : vector<1x24xf32> to vector<8x24xf32>
    %12 = arith.addf %10, %11 : vector<8x24xf32>
    %13 = vector.extract_strided_slice %12 {offsets = [0, 0], sizes = [8, 8], strides = [1, 1]} : vector<8x24xf32> to vector<8x8xf32>
    %14 = vector.extract_strided_slice %12 {offsets = [0, 8], sizes = [8, 8], strides = [1, 1]} : vector<8x24xf32> to vector<8x8xf32>
    %15 = vector.extract_strided_slice %12 {offsets = [0, 16], sizes = [8, 8], strides = [1, 1]} : vector<8x24xf32> to vector<8x8xf32>
    %cst_18 = arith.constant dense<0.000000e+00> : vector<8x8xf32>
    %16 = tpu.matmul %13, %14, %cst_18 {dimension_numbers = #tpu.dot_dimension_numbers<[1], [1], [0], [0], [0, 0, 1, 0], [], []>} : vector<8x8xf32>, vector<8x8xf32>, vector<8x8xf32> -> vector<8x8xf32>
    %cst_19 = arith.constant 0.353553385 : f32
    %17 = vector.broadcast %cst_19 : f32 to vector<8x8xf32>
    %18 = arith.mulf %16, %17 : vector<8x8xf32>
    %cst_20 = arith.constant dense<0xFF800000> : vector<8xf32>
    %19 = vector.multi_reduction <maximumf>, %18, %cst_20 [0] : vector<8x8xf32> to vector<8xf32>
    %20 = vector.shape_cast %19 : vector<8xf32> to vector<1x8xf32>
    %21 = vector.broadcast %20 : vector<1x8xf32> to vector<8x8xf32>
    %22 = arith.subf %18, %21 : vector<8x8xf32>
    %23 = math.exp %22 : vector<8x8xf32>
    %cst_21 = arith.constant dense<0.000000e+00> : vector<8xf32>
    %24 = vector.multi_reduction <add>, %23, %cst_21 [0] : vector<8x8xf32> to vector<8xf32>
    %25 = vector.shape_cast %24 : vector<8xf32> to vector<1x8xf32>
    %26 = tpu.reciprocal %25 {approx = true} : vector<1x8xf32> -> vector<1x8xf32>
    %27 = vector.broadcast %26 : vector<1x8xf32> to vector<8x8xf32>
    %28 = arith.mulf %23, %27 : vector<8x8xf32>
    %cst_22 = arith.constant dense<0.000000e+00> : vector<8x8xf32>
    %29 = tpu.matmul %28, %15, %cst_22 {dimension_numbers = #tpu.dot_dimension_numbers<[1], [0], [0], [1], [0, 0, 1, 1], [], []>} : vector<8x8xf32>, vector<8x8xf32>, vector<8x8xf32> -> vector<8x8xf32>
    %cst_23 = arith.constant dense<0.000000e+00> : vector<8x64xf32>
    %30 = tpu.matmul %29, %4, %cst_23 {dimension_numbers = #tpu.dot_dimension_numbers<[1], [0], [0], [1], [0, 0, 1, 1], [], []>} : vector<8x8xf32>, vector<8x64xf32>, vector<8x64xf32> -> vector<8x64xf32>
    %31 = vector.broadcast %5 : vector<1x64xf32> to vector<8x64xf32>
    %32 = arith.addf %30, %31 : vector<8x64xf32>
    %33 = arith.addf %32, %1 : vector<8x64xf32>
    %cst_24 = arith.constant dense<0.000000e+00> : vector<8xf32>
    %34 = vector.multi_reduction <add>, %33, %cst_24 [1] : vector<8x64xf32> to vector<8xf32>
    %35 = vector.shape_cast %34 : vector<8xf32> to vector<8x1xf32>
    %cst_25 = arith.constant 6.400000e+01 : f32
    %36 = vector.broadcast %cst_25 : f32 to vector<8x1xf32>
    %37 = arith.divf %35, %36 : vector<8x1xf32>
    %38 = vector.broadcast %37 : vector<8x1xf32> to vector<8x64xf32>
    %39 = arith.subf %33, %38 : vector<8x64xf32>
    %40 = arith.mulf %39, %39 : vector<8x64xf32>
    %cst_26 = arith.constant dense<0.000000e+00> : vector<8xf32>
    %41 = vector.multi_reduction <add>, %40, %cst_26 [1] : vector<8x64xf32> to vector<8xf32>
    %42 = vector.shape_cast %41 : vector<8xf32> to vector<8x1xf32>
    %cst_27 = arith.constant 6.400000e+01 : f32
    %43 = vector.broadcast %cst_27 : f32 to vector<8x1xf32>
    %44 = arith.divf %42, %43 : vector<8x1xf32>
    %45 = vector.broadcast %37 : vector<8x1xf32> to vector<8x64xf32>
    %46 = arith.subf %33, %45 : vector<8x64xf32>
    %cst_28 = arith.constant 9.99999974E-6 : f32
    %47 = vector.broadcast %cst_28 : f32 to vector<8x1xf32>
    %48 = arith.addf %44, %47 : vector<8x1xf32>
    %49 = math.rsqrt %48 : vector<8x1xf32>
    %50 = vector.broadcast %49 : vector<8x1xf32> to vector<8x64xf32>
    %51 = arith.mulf %46, %50 : vector<8x64xf32>
    %52 = vector.broadcast %6 : vector<1x64xf32> to vector<8x64xf32>
    %53 = arith.mulf %51, %52 : vector<8x64xf32>
    %54 = vector.broadcast %7 : vector<1x64xf32> to vector<8x64xf32>
    %55 = arith.addf %53, %54 : vector<8x64xf32>
    %cst_29 = arith.constant dense<0.000000e+00> : vector<8x64xf32>
    %56 = tpu.matmul %55, %8, %cst_29 {dimension_numbers = #tpu.dot_dimension_numbers<[1], [0], [0], [1], [0, 0, 1, 1], [], []>} : vector<8x64xf32>, vector<64x64xf32>, vector<8x64xf32> -> vector<8x64xf32>
    %57 = vector.broadcast %9 : vector<1x64xf32> to vector<8x64xf32>
    %58 = arith.addf %56, %57 : vector<8x64xf32>
    %59 = arith.addf %55, %58 : vector<8x64xf32>
    %cst_30 = arith.constant dense<0.000000e+00> : vector<8xf32>
    %60 = vector.multi_reduction <add>, %59, %cst_30 [1] : vector<8x64xf32> to vector<8xf32>
    %61 = vector.shape_cast %60 : vector<8xf32> to vector<8x1xf32>
    %cst_31 = arith.constant 6.400000e+01 : f32
    %62 = vector.broadcast %cst_31 : f32 to vector<8x1xf32>
    %63 = arith.divf %61, %62 : vector<8x1xf32>
    %64 = vector.broadcast %63 : vector<8x1xf32> to vector<8x64xf32>
    %65 = arith.subf %59, %64 : vector<8x64xf32>
    %66 = arith.mulf %65, %65 : vector<8x64xf32>
    %cst_32 = arith.constant dense<0.000000e+00> : vector<8xf32>
    %67 = vector.multi_reduction <add>, %66, %cst_32 [1] : vector<8x64xf32> to vector<8xf32>
    %68 = vector.shape_cast %67 : vector<8xf32> to vector<8x1xf32>
    %cst_33 = arith.constant 6.400000e+01 : f32
    %69 = vector.broadcast %cst_33 : f32 to vector<8x1xf32>
    %70 = arith.divf %68, %69 : vector<8x1xf32>
    %71 = vector.broadcast %63 : vector<8x1xf32> to vector<8x64xf32>
    %72 = arith.subf %59, %71 : vector<8x64xf32>
    %cst_34 = arith.constant 9.99999974E-6 : f32
    %73 = vector.broadcast %cst_34 : f32 to vector<8x1xf32>
    %74 = arith.addf %70, %73 : vector<8x1xf32>
    %75 = math.rsqrt %74 : vector<8x1xf32>
    %76 = vector.broadcast %75 : vector<8x1xf32> to vector<8x64xf32>
    %77 = arith.mulf %72, %76 : vector<8x64xf32>
    %78 = vector.broadcast %6 : vector<1x64xf32> to vector<8x64xf32>
    %79 = arith.mulf %77, %78 : vector<8x64xf32>
    %80 = vector.broadcast %7 : vector<1x64xf32> to vector<8x64xf32>
    %81 = arith.addf %79, %80 : vector<8x64xf32>
    %c1_i32 = arith.constant 1 : i32
    %cst_35 = arith.constant dense<0.000000e+00> : vector<8x24xf32>
    %82 = tpu.matmul %81, %2, %cst_35 {dimension_numbers = #tpu.dot_dimension_numbers<[1], [0], [0], [1], [0, 0, 1, 1], [], []>} : vector<8x64xf32>, vector<64x24xf32>, vector<8x24xf32> -> vector<8x24xf32>
    %83 = vector.broadcast %3 : vector<1x24xf32> to vector<8x24xf32>
    %84 = arith.addf %82, %83 : vector<8x24xf32>
    %85 = vector.extract_strided_slice %84 {offsets = [0, 0], sizes = [8, 8], strides = [1, 1]} : vector<8x24xf32> to vector<8x8xf32>
    %86 = vector.extract_strided_slice %84 {offsets = [0, 8], sizes = [8, 8], strides = [1, 1]} : vector<8x24xf32> to vector<8x8xf32>
    %87 = vector.extract_strided_slice %84 {offsets = [0, 16], sizes = [8, 8], strides = [1, 1]} : vector<8x24xf32> to vector<8x8xf32>
    %cst_36 = arith.constant dense<0.000000e+00> : vector<8x8xf32>
    %88 = tpu.matmul %85, %86, %cst_36 {dimension_numbers = #tpu.dot_dimension_numbers<[1], [1], [0], [0], [0, 0, 1, 0], [], []>} : vector<8x8xf32>, vector<8x8xf32>, vector<8x8xf32> -> vector<8x8xf32>
    %cst_37 = arith.constant 0.353553385 : f32
    %89 = vector.broadcast %cst_37 : f32 to vector<8x8xf32>
    %90 = arith.mulf %88, %89 : vector<8x8xf32>
    %cst_38 = arith.constant dense<0xFF800000> : vector<8xf32>
    %91 = vector.multi_reduction <maximumf>, %90, %cst_38 [0] : vector<8x8xf32> to vector<8xf32>
    %92 = vector.shape_cast %91 : vector<8xf32> to vector<1x8xf32>
    %93 = vector.broadcast %92 : vector<1x8xf32> to vector<8x8xf32>
    %94 = arith.subf %90, %93 : vector<8x8xf32>
    %95 = math.exp %94 : vector<8x8xf32>
    %cst_39 = arith.constant dense<0.000000e+00> : vector<8xf32>
    %96 = vector.multi_reduction <add>, %95, %cst_39 [0] : vector<8x8xf32> to vector<8xf32>
    %97 = vector.shape_cast %96 : vector<8xf32> to vector<1x8xf32>
    %98 = tpu.reciprocal %97 {approx = true} : vector<1x8xf32> -> vector<1x8xf32>
    %99 = vector.broadcast %98 : vector<1x8xf32> to vector<8x8xf32>
    %100 = arith.mulf %95, %99 : vector<8x8xf32>
    %cst_40 = arith.constant dense<0.000000e+00> : vector<8x8xf32>
    %101 = tpu.matmul %100, %87, %cst_40 {dimension_numbers = #tpu.dot_dimension_numbers<[1], [0], [0], [1], [0, 0, 1, 1], [], []>} : vector<8x8xf32>, vector<8x8xf32>, vector<8x8xf32> -> vector<8x8xf32>
    %cst_41 = arith.constant dense<0.000000e+00> : vector<8x64xf32>
    %102 = tpu.matmul %101, %4, %cst_41 {dimension_numbers = #tpu.dot_dimension_numbers<[1], [0], [0], [1], [0, 0, 1, 1], [], []>} : vector<8x8xf32>, vector<8x64xf32>, vector<8x64xf32> -> vector<8x64xf32>
    %103 = vector.broadcast %5 : vector<1x64xf32> to vector<8x64xf32>
    %104 = arith.addf %102, %103 : vector<8x64xf32>
    %105 = arith.addf %104, %81 : vector<8x64xf32>
    %cst_42 = arith.constant dense<0.000000e+00> : vector<8xf32>
    %106 = vector.multi_reduction <add>, %105, %cst_42 [1] : vector<8x64xf32> to vector<8xf32>
    %107 = vector.shape_cast %106 : vector<8xf32> to vector<8x1xf32>
    %cst_43 = arith.constant 6.400000e+01 : f32
    %108 = vector.broadcast %cst_43 : f32 to vector<8x1xf32>
    %109 = arith.divf %107, %108 : vector<8x1xf32>
    %110 = vector.broadcast %109 : vector<8x1xf32> to vector<8x64xf32>
    %111 = arith.subf %105, %110 : vector<8x64xf32>
    %112 = arith.mulf %111, %111 : vector<8x64xf32>
    %cst_44 = arith.constant dense<0.000000e+00> : vector<8xf32>
    %113 = vector.multi_reduction <add>, %112, %cst_44 [1] : vector<8x64xf32> to vector<8xf32>
    %114 = vector.shape_cast %113 : vector<8xf32> to vector<8x1xf32>
    %cst_45 = arith.constant 6.400000e+01 : f32
    %115 = vector.broadcast %cst_45 : f32 to vector<8x1xf32>
    %116 = arith.divf %114, %115 : vector<8x1xf32>
    %117 = vector.broadcast %109 : vector<8x1xf32> to vector<8x64xf32>
    %118 = arith.subf %105, %117 : vector<8x64xf32>
    %cst_46 = arith.constant 9.99999974E-6 : f32
    %119 = vector.broadcast %cst_46 : f32 to vector<8x1xf32>
    %120 = arith.addf %116, %119 : vector<8x1xf32>
    %121 = math.rsqrt %120 : vector<8x1xf32>
    %122 = vector.broadcast %121 : vector<8x1xf32> to vector<8x64xf32>
    %123 = arith.mulf %118, %122 : vector<8x64xf32>
    %124 = vector.broadcast %6 : vector<1x64xf32> to vector<8x64xf32>
    %125 = arith.mulf %123, %124 : vector<8x64xf32>
    %126 = vector.broadcast %7 : vector<1x64xf32> to vector<8x64xf32>
    %127 = arith.addf %125, %126 : vector<8x64xf32>
    %cst_47 = arith.constant dense<0.000000e+00> : vector<8x64xf32>
    %128 = tpu.matmul %127, %8, %cst_47 {dimension_numbers = #tpu.dot_dimension_numbers<[1], [0], [0], [1], [0, 0, 1, 1], [], []>} : vector<8x64xf32>, vector<64x64xf32>, vector<8x64xf32> -> vector<8x64xf32>
    %129 = vector.broadcast %9 : vector<1x64xf32> to vector<8x64xf32>
    %130 = arith.addf %128, %129 : vector<8x64xf32>
    %131 = arith.addf %127, %130 : vector<8x64xf32>
    %cst_48 = arith.constant dense<0.000000e+00> : vector<8xf32>
    %132 = vector.multi_reduction <add>, %131, %cst_48 [1] : vector<8x64xf32> to vector<8xf32>
    %133 = vector.shape_cast %132 : vector<8xf32> to vector<8x1xf32>
    %cst_49 = arith.constant 6.400000e+01 : f32
    %134 = vector.broadcast %cst_49 : f32 to vector<8x1xf32>
    %135 = arith.divf %133, %134 : vector<8x1xf32>
    %136 = vector.broadcast %135 : vector<8x1xf32> to vector<8x64xf32>
    %137 = arith.subf %131, %136 : vector<8x64xf32>
    %138 = arith.mulf %137, %137 : vector<8x64xf32>
    %cst_50 = arith.constant dense<0.000000e+00> : vector<8xf32>
    %139 = vector.multi_reduction <add>, %138, %cst_50 [1] : vector<8x64xf32> to vector<8xf32>
    %140 = vector.shape_cast %139 : vector<8xf32> to vector<8x1xf32>
    %cst_51 = arith.constant 6.400000e+01 : f32
    %141 = vector.broadcast %cst_51 : f32 to vector<8x1xf32>
    %142 = arith.divf %140, %141 : vector<8x1xf32>
    %143 = vector.broadcast %135 : vector<8x1xf32> to vector<8x64xf32>
    %144 = arith.subf %131, %143 : vector<8x64xf32>
    %cst_52 = arith.constant 9.99999974E-6 : f32
    %145 = vector.broadcast %cst_52 : f32 to vector<8x1xf32>
    %146 = arith.addf %142, %145 : vector<8x1xf32>
    %147 = math.rsqrt %146 : vector<8x1xf32>
    %148 = vector.broadcast %147 : vector<8x1xf32> to vector<8x64xf32>
    %149 = arith.mulf %144, %148 : vector<8x64xf32>
    %150 = vector.broadcast %6 : vector<1x64xf32> to vector<8x64xf32>
    %151 = arith.mulf %149, %150 : vector<8x64xf32>
    %152 = vector.broadcast %7 : vector<1x64xf32> to vector<8x64xf32>
    %153 = arith.addf %151, %152 : vector<8x64xf32>
    %c2_i32 = arith.constant 2 : i32
    %cst_53 = arith.constant dense<0.000000e+00> : vector<8x24xf32>
    %154 = tpu.matmul %153, %2, %cst_53 {dimension_numbers = #tpu.dot_dimension_numbers<[1], [0], [0], [1], [0, 0, 1, 1], [], []>} : vector<8x64xf32>, vector<64x24xf32>, vector<8x24xf32> -> vector<8x24xf32>
    %155 = vector.broadcast %3 : vector<1x24xf32> to vector<8x24xf32>
    %156 = arith.addf %154, %155 : vector<8x24xf32>
    %157 = vector.extract_strided_slice %156 {offsets = [0, 0], sizes = [8, 8], strides = [1, 1]} : vector<8x24xf32> to vector<8x8xf32>
    %158 = vector.extract_strided_slice %156 {offsets = [0, 8], sizes = [8, 8], strides = [1, 1]} : vector<8x24xf32> to vector<8x8xf32>
    %159 = vector.extract_strided_slice %156 {offsets = [0, 16], sizes = [8, 8], strides = [1, 1]} : vector<8x24xf32> to vector<8x8xf32>
    %cst_54 = arith.constant dense<0.000000e+00> : vector<8x8xf32>
    %160 = tpu.matmul %157, %158, %cst_54 {dimension_numbers = #tpu.dot_dimension_numbers<[1], [1], [0], [0], [0, 0, 1, 0], [], []>} : vector<8x8xf32>, vector<8x8xf32>, vector<8x8xf32> -> vector<8x8xf32>
    %cst_55 = arith.constant 0.353553385 : f32
    %161 = vector.broadcast %cst_55 : f32 to vector<8x8xf32>
    %162 = arith.mulf %160, %161 : vector<8x8xf32>
    %cst_56 = arith.constant dense<0xFF800000> : vector<8xf32>
    %163 = vector.multi_reduction <maximumf>, %162, %cst_56 [0] : vector<8x8xf32> to vector<8xf32>
    %164 = vector.shape_cast %163 : vector<8xf32> to vector<1x8xf32>
    %165 = vector.broadcast %164 : vector<1x8xf32> to vector<8x8xf32>
    %166 = arith.subf %162, %165 : vector<8x8xf32>
    %167 = math.exp %166 : vector<8x8xf32>
    %cst_57 = arith.constant dense<0.000000e+00> : vector<8xf32>
    %168 = vector.multi_reduction <add>, %167, %cst_57 [0] : vector<8x8xf32> to vector<8xf32>
    %169 = vector.shape_cast %168 : vector<8xf32> to vector<1x8xf32>
    %170 = tpu.reciprocal %169 {approx = true} : vector<1x8xf32> -> vector<1x8xf32>
    %171 = vector.broadcast %170 : vector<1x8xf32> to vector<8x8xf32>
    %172 = arith.mulf %167, %171 : vector<8x8xf32>
    %cst_58 = arith.constant dense<0.000000e+00> : vector<8x8xf32>
    %173 = tpu.matmul %172, %159, %cst_58 {dimension_numbers = #tpu.dot_dimension_numbers<[1], [0], [0], [1], [0, 0, 1, 1], [], []>} : vector<8x8xf32>, vector<8x8xf32>, vector<8x8xf32> -> vector<8x8xf32>
    %cst_59 = arith.constant dense<0.000000e+00> : vector<8x64xf32>
    %174 = tpu.matmul %173, %4, %cst_59 {dimension_numbers = #tpu.dot_dimension_numbers<[1], [0], [0], [1], [0, 0, 1, 1], [], []>} : vector<8x8xf32>, vector<8x64xf32>, vector<8x64xf32> -> vector<8x64xf32>
    %175 = vector.broadcast %5 : vector<1x64xf32> to vector<8x64xf32>
    %176 = arith.addf %174, %175 : vector<8x64xf32>
    %177 = arith.addf %176, %153 : vector<8x64xf32>
    %cst_60 = arith.constant dense<0.000000e+00> : vector<8xf32>
    %178 = vector.multi_reduction <add>, %177, %cst_60 [1] : vector<8x64xf32> to vector<8xf32>
    %179 = vector.shape_cast %178 : vector<8xf32> to vector<8x1xf32>
    %cst_61 = arith.constant 6.400000e+01 : f32
    %180 = vector.broadcast %cst_61 : f32 to vector<8x1xf32>
    %181 = arith.divf %179, %180 : vector<8x1xf32>
    %182 = vector.broadcast %181 : vector<8x1xf32> to vector<8x64xf32>
    %183 = arith.subf %177, %182 : vector<8x64xf32>
    %184 = arith.mulf %183, %183 : vector<8x64xf32>
    %cst_62 = arith.constant dense<0.000000e+00> : vector<8xf32>
    %185 = vector.multi_reduction <add>, %184, %cst_62 [1] : vector<8x64xf32> to vector<8xf32>
    %186 = vector.shape_cast %185 : vector<8xf32> to vector<8x1xf32>
    %cst_63 = arith.constant 6.400000e+01 : f32
    %187 = vector.broadcast %cst_63 : f32 to vector<8x1xf32>
    %188 = arith.divf %186, %187 : vector<8x1xf32>
    %189 = vector.broadcast %181 : vector<8x1xf32> to vector<8x64xf32>
    %190 = arith.subf %177, %189 : vector<8x64xf32>
    %cst_64 = arith.constant 9.99999974E-6 : f32
    %191 = vector.broadcast %cst_64 : f32 to vector<8x1xf32>
    %192 = arith.addf %188, %191 : vector<8x1xf32>
    %193 = math.rsqrt %192 : vector<8x1xf32>
    %194 = vector.broadcast %193 : vector<8x1xf32> to vector<8x64xf32>
    %195 = arith.mulf %190, %194 : vector<8x64xf32>
    %196 = vector.broadcast %6 : vector<1x64xf32> to vector<8x64xf32>
    %197 = arith.mulf %195, %196 : vector<8x64xf32>
    %198 = vector.broadcast %7 : vector<1x64xf32> to vector<8x64xf32>
    %199 = arith.addf %197, %198 : vector<8x64xf32>
    %cst_65 = arith.constant dense<0.000000e+00> : vector<8x64xf32>
    %200 = tpu.matmul %199, %8, %cst_65 {dimension_numbers = #tpu.dot_dimension_numbers<[1], [0], [0], [1], [0, 0, 1, 1], [], []>} : vector<8x64xf32>, vector<64x64xf32>, vector<8x64xf32> -> vector<8x64xf32>
    %201 = vector.broadcast %9 : vector<1x64xf32> to vector<8x64xf32>
    %202 = arith.addf %200, %201 : vector<8x64xf32>
    %203 = arith.addf %199, %202 : vector<8x64xf32>
    %cst_66 = arith.constant dense<0.000000e+00> : vector<8xf32>
    %204 = vector.multi_reduction <add>, %203, %cst_66 [1] : vector<8x64xf32> to vector<8xf32>
    %205 = vector.shape_cast %204 : vector<8xf32> to vector<8x1xf32>
    %cst_67 = arith.constant 6.400000e+01 : f32
    %206 = vector.broadcast %cst_67 : f32 to vector<8x1xf32>
    %207 = arith.divf %205, %206 : vector<8x1xf32>
    %208 = vector.broadcast %207 : vector<8x1xf32> to vector<8x64xf32>
    %209 = arith.subf %203, %208 : vector<8x64xf32>
    %210 = arith.mulf %209, %209 : vector<8x64xf32>
    %cst_68 = arith.constant dense<0.000000e+00> : vector<8xf32>
    %211 = vector.multi_reduction <add>, %210, %cst_68 [1] : vector<8x64xf32> to vector<8xf32>
    %212 = vector.shape_cast %211 : vector<8xf32> to vector<8x1xf32>
    %cst_69 = arith.constant 6.400000e+01 : f32
    %213 = vector.broadcast %cst_69 : f32 to vector<8x1xf32>
    %214 = arith.divf %212, %213 : vector<8x1xf32>
    %215 = vector.broadcast %207 : vector<8x1xf32> to vector<8x64xf32>
    %216 = arith.subf %203, %215 : vector<8x64xf32>
    %cst_70 = arith.constant 9.99999974E-6 : f32
    %217 = vector.broadcast %cst_70 : f32 to vector<8x1xf32>
    %218 = arith.addf %214, %217 : vector<8x1xf32>
    %219 = math.rsqrt %218 : vector<8x1xf32>
    %220 = vector.broadcast %219 : vector<8x1xf32> to vector<8x64xf32>
    %221 = arith.mulf %216, %220 : vector<8x64xf32>
    %222 = vector.broadcast %6 : vector<1x64xf32> to vector<8x64xf32>
    %223 = arith.mulf %221, %222 : vector<8x64xf32>
    %224 = vector.broadcast %7 : vector<1x64xf32> to vector<8x64xf32>
    %225 = arith.addf %223, %224 : vector<8x64xf32>
    %c3_i32 = arith.constant 3 : i32
    %cst_71 = arith.constant dense<0.000000e+00> : vector<8x24xf32>
    %226 = tpu.matmul %225, %2, %cst_71 {dimension_numbers = #tpu.dot_dimension_numbers<[1], [0], [0], [1], [0, 0, 1, 1], [], []>} : vector<8x64xf32>, vector<64x24xf32>, vector<8x24xf32> -> vector<8x24xf32>
    %227 = vector.broadcast %3 : vector<1x24xf32> to vector<8x24xf32>
    %228 = arith.addf %226, %227 : vector<8x24xf32>
    %229 = vector.extract_strided_slice %228 {offsets = [0, 0], sizes = [8, 8], strides = [1, 1]} : vector<8x24xf32> to vector<8x8xf32>
    %230 = vector.extract_strided_slice %228 {offsets = [0, 8], sizes = [8, 8], strides = [1, 1]} : vector<8x24xf32> to vector<8x8xf32>
    %231 = vector.extract_strided_slice %228 {offsets = [0, 16], sizes = [8, 8], strides = [1, 1]} : vector<8x24xf32> to vector<8x8xf32>
    %cst_72 = arith.constant dense<0.000000e+00> : vector<8x8xf32>
    %232 = tpu.matmul %229, %230, %cst_72 {dimension_numbers = #tpu.dot_dimension_numbers<[1], [1], [0], [0], [0, 0, 1, 0], [], []>} : vector<8x8xf32>, vector<8x8xf32>, vector<8x8xf32> -> vector<8x8xf32>
    %cst_73 = arith.constant 0.353553385 : f32
    %233 = vector.broadcast %cst_73 : f32 to vector<8x8xf32>
    %234 = arith.mulf %232, %233 : vector<8x8xf32>
    %cst_74 = arith.constant dense<0xFF800000> : vector<8xf32>
    %235 = vector.multi_reduction <maximumf>, %234, %cst_74 [0] : vector<8x8xf32> to vector<8xf32>
    %236 = vector.shape_cast %235 : vector<8xf32> to vector<1x8xf32>
    %237 = vector.broadcast %236 : vector<1x8xf32> to vector<8x8xf32>
    %238 = arith.subf %234, %237 : vector<8x8xf32>
    %239 = math.exp %238 : vector<8x8xf32>
    %cst_75 = arith.constant dense<0.000000e+00> : vector<8xf32>
    %240 = vector.multi_reduction <add>, %239, %cst_75 [0] : vector<8x8xf32> to vector<8xf32>
    %241 = vector.shape_cast %240 : vector<8xf32> to vector<1x8xf32>
    %242 = tpu.reciprocal %241 {approx = true} : vector<1x8xf32> -> vector<1x8xf32>
    %243 = vector.broadcast %242 : vector<1x8xf32> to vector<8x8xf32>
    %244 = arith.mulf %239, %243 : vector<8x8xf32>
    %cst_76 = arith.constant dense<0.000000e+00> : vector<8x8xf32>
    %245 = tpu.matmul %244, %231, %cst_76 {dimension_numbers = #tpu.dot_dimension_numbers<[1], [0], [0], [1], [0, 0, 1, 1], [], []>} : vector<8x8xf32>, vector<8x8xf32>, vector<8x8xf32> -> vector<8x8xf32>
    %cst_77 = arith.constant dense<0.000000e+00> : vector<8x64xf32>
    %246 = tpu.matmul %245, %4, %cst_77 {dimension_numbers = #tpu.dot_dimension_numbers<[1], [0], [0], [1], [0, 0, 1, 1], [], []>} : vector<8x8xf32>, vector<8x64xf32>, vector<8x64xf32> -> vector<8x64xf32>
    %247 = vector.broadcast %5 : vector<1x64xf32> to vector<8x64xf32>
    %248 = arith.addf %246, %247 : vector<8x64xf32>
    %249 = arith.addf %248, %225 : vector<8x64xf32>
    %cst_78 = arith.constant dense<0.000000e+00> : vector<8xf32>
    %250 = vector.multi_reduction <add>, %249, %cst_78 [1] : vector<8x64xf32> to vector<8xf32>
    %251 = vector.shape_cast %250 : vector<8xf32> to vector<8x1xf32>
    %cst_79 = arith.constant 6.400000e+01 : f32
    %252 = vector.broadcast %cst_79 : f32 to vector<8x1xf32>
    %253 = arith.divf %251, %252 : vector<8x1xf32>
    %254 = vector.broadcast %253 : vector<8x1xf32> to vector<8x64xf32>
    %255 = arith.subf %249, %254 : vector<8x64xf32>
    %256 = arith.mulf %255, %255 : vector<8x64xf32>
    %cst_80 = arith.constant dense<0.000000e+00> : vector<8xf32>
    %257 = vector.multi_reduction <add>, %256, %cst_80 [1] : vector<8x64xf32> to vector<8xf32>
    %258 = vector.shape_cast %257 : vector<8xf32> to vector<8x1xf32>
    %cst_81 = arith.constant 6.400000e+01 : f32
    %259 = vector.broadcast %cst_81 : f32 to vector<8x1xf32>
    %260 = arith.divf %258, %259 : vector<8x1xf32>
    %261 = vector.broadcast %253 : vector<8x1xf32> to vector<8x64xf32>
    %262 = arith.subf %249, %261 : vector<8x64xf32>
    %cst_82 = arith.constant 9.99999974E-6 : f32
    %263 = vector.broadcast %cst_82 : f32 to vector<8x1xf32>
    %264 = arith.addf %260, %263 : vector<8x1xf32>
    %265 = math.rsqrt %264 : vector<8x1xf32>
    %266 = vector.broadcast %265 : vector<8x1xf32> to vector<8x64xf32>
    %267 = arith.mulf %262, %266 : vector<8x64xf32>
    %268 = vector.broadcast %6 : vector<1x64xf32> to vector<8x64xf32>
    %269 = arith.mulf %267, %268 : vector<8x64xf32>
    %270 = vector.broadcast %7 : vector<1x64xf32> to vector<8x64xf32>
    %271 = arith.addf %269, %270 : vector<8x64xf32>
    %cst_83 = arith.constant dense<0.000000e+00> : vector<8x64xf32>
    %272 = tpu.matmul %271, %8, %cst_83 {dimension_numbers = #tpu.dot_dimension_numbers<[1], [0], [0], [1], [0, 0, 1, 1], [], []>} : vector<8x64xf32>, vector<64x64xf32>, vector<8x64xf32> -> vector<8x64xf32>
    %273 = vector.broadcast %9 : vector<1x64xf32> to vector<8x64xf32>
    %274 = arith.addf %272, %273 : vector<8x64xf32>
    %275 = arith.addf %271, %274 : vector<8x64xf32>
    %cst_84 = arith.constant dense<0.000000e+00> : vector<8xf32>
    %276 = vector.multi_reduction <add>, %275, %cst_84 [1] : vector<8x64xf32> to vector<8xf32>
    %277 = vector.shape_cast %276 : vector<8xf32> to vector<8x1xf32>
    %cst_85 = arith.constant 6.400000e+01 : f32
    %278 = vector.broadcast %cst_85 : f32 to vector<8x1xf32>
    %279 = arith.divf %277, %278 : vector<8x1xf32>
    %280 = vector.broadcast %279 : vector<8x1xf32> to vector<8x64xf32>
    %281 = arith.subf %275, %280 : vector<8x64xf32>
    %282 = arith.mulf %281, %281 : vector<8x64xf32>
    %cst_86 = arith.constant dense<0.000000e+00> : vector<8xf32>
    %283 = vector.multi_reduction <add>, %282, %cst_86 [1] : vector<8x64xf32> to vector<8xf32>
    %284 = vector.shape_cast %283 : vector<8xf32> to vector<8x1xf32>
    %cst_87 = arith.constant 6.400000e+01 : f32
    %285 = vector.broadcast %cst_87 : f32 to vector<8x1xf32>
    %286 = arith.divf %284, %285 : vector<8x1xf32>
    %287 = vector.broadcast %279 : vector<8x1xf32> to vector<8x64xf32>
    %288 = arith.subf %275, %287 : vector<8x64xf32>
    %cst_88 = arith.constant 9.99999974E-6 : f32
    %289 = vector.broadcast %cst_88 : f32 to vector<8x1xf32>
    %290 = arith.addf %286, %289 : vector<8x1xf32>
    %291 = math.rsqrt %290 : vector<8x1xf32>
    %292 = vector.broadcast %291 : vector<8x1xf32> to vector<8x64xf32>
    %293 = arith.mulf %288, %292 : vector<8x64xf32>
    %294 = vector.broadcast %6 : vector<1x64xf32> to vector<8x64xf32>
    %295 = arith.mulf %293, %294 : vector<8x64xf32>
    %296 = vector.broadcast %7 : vector<1x64xf32> to vector<8x64xf32>
    %297 = arith.addf %295, %296 : vector<8x64xf32>
    %c0_89 = arith.constant 0 : index
    %c0_90 = arith.constant 0 : index
    %c0_91 = arith.constant 0 : index
    %298 = vector.load %arg10[%c0_89, %c0_90, %c0_91] : memref<1x8x64xf32, #tpu.memory_space<vmem>>, vector<1x8x64xf32>
    %299 = vector.shape_cast %298 : vector<1x8x64xf32> to vector<8x64xf32>
    %300 = vector.shape_cast %297 : vector<8x64xf32> to vector<1x8x64xf32>
    tpu.vector_store %arg10[%c0_89, %c0_90, %c0_91], %300 {strides = array<i32>} : memref<1x8x64xf32, #tpu.memory_space<vmem>>, vector<1x8x64xf32>,
    return
  }
  func.func @transform_0(%arg0: i32) -> (i32, i32, i32) {
    %c0_i32 = arith.constant 0 : i32
    %c0_i32_0 = arith.constant 0 : i32
    %c0_i32_1 = arith.constant 0 : i32
    return %arg0, %c0_i32, %c0_i32_0 : i32, i32, i32
  }
  func.func @transform_1(%arg0: i32) -> (i32, i32) {
    %c0_i32 = arith.constant 0 : i32
    %c0_i32_0 = arith.constant 0 : i32
    %c0_i32_1 = arith.constant 0 : i32
    return %c0_i32, %c0_i32_0 : i32, i32
  }
  func.func @transform_2(%arg0: i32) -> (i32, i32) {
    %c0_i32 = arith.constant 0 : i32
    %c0_i32_0 = arith.constant 0 : i32
    %c0_i32_1 = arith.constant 0 : i32
    return %c0_i32, %c0_i32_0 : i32, i32
  }
  func.func @transform_3(%arg0: i32) -> (i32, i32) {
    %c0_i32 = arith.constant 0 : i32
    %c0_i32_0 = arith.constant 0 : i32
    %c0_i32_1 = arith.constant 0 : i32
    return %c0_i32, %c0_i32_0 : i32, i32
  }
  func.func @transform_4(%arg0: i32) -> (i32, i32) {
    %c0_i32 = arith.constant 0 : i32
    %c0_i32_0 = arith.constant 0 : i32
    %c0_i32_1 = arith.constant 0 : i32
    return %c0_i32, %c0_i32_0 : i32, i32
  }
  func.func @transform_5(%arg0: i32) -> (i32, i32) {
    %c0_i32 = arith.constant 0 : i32
    %c0_i32_0 = arith.constant 0 : i32
    %c0_i32_1 = arith.constant 0 : i32
    return %c0_i32, %c0_i32_0 : i32, i32
  }
  func.func @transform_6(%arg0: i32) -> (i32, i32) {
    %c0_i32 = arith.constant 0 : i32
    %c0_i32_0 = arith.constant 0 : i32
    %c0_i32_1 = arith.constant 0 : i32
    return %c0_i32, %c0_i32_0 : i32, i32
  }
  func.func @transform_7(%arg0: i32) -> (i32, i32) {
    %c0_i32 = arith.constant 0 : i32
    %c0_i32_0 = arith.constant 0 : i32
    %c0_i32_1 = arith.constant 0 : i32
    return %c0_i32, %c0_i32_0 : i32, i32
  }
  func.func @transform_8(%arg0: i32) -> (i32, i32) {
    %c0_i32 = arith.constant 0 : i32
    %c0_i32_0 = arith.constant 0 : i32
    %c0_i32_1 = arith.constant 0 : i32
    return %c0_i32, %c0_i32_0 : i32, i32
  }
  func.func @transform_9(%arg0: i32) -> (i32, i32, i32) {
    %c0_i32 = arith.constant 0 : i32
    %c0_i32_0 = arith.constant 0 : i32
    %c0_i32_1 = arith.constant 0 : i32
    return %arg0, %c0_i32, %c0_i32_0 : i32, i32, i32
  }
}

</mosaic_0001>

<llo_original>
// kernel: tpu_custom_call.1
$region0: #{tpu_custom_call.1}
  #allocation0 [shape = 'u32[]', space=smem, size = 0x4, offset = 0x4, fixed_abs, tag = 'smem constant byte address 0x4 - core index']
  #allocation1 [shape = 'u32[72,128]{1,0:T(1,128)}', space=vmem, size = 0x9000, scoped, tag = 'internal scratch']
  %s0 = inlined_call_operand.vmem [shape: f32[2,8,64], index: 0, kind: input, shape index: {}]
  %s1 = inlined_call_operand.vmem [shape: f32[64,24], index: 1, kind: input, shape index: {}]
  %s2 = inlined_call_operand.vmem [shape: f32[1,24], index: 2, kind: input, shape index: {}]
  %s3 = inlined_call_operand.vmem [shape: f32[8,64], index: 3, kind: input, shape index: {}]
  %s4 = inlined_call_operand.vmem [shape: f32[1,64], index: 4, kind: input, shape index: {}]
  %s5 = inlined_call_operand.vmem [shape: f32[1,64], index: 5, kind: input, shape index: {}]
  %s6 = inlined_call_operand.vmem [shape: f32[1,64], index: 6, kind: input, shape index: {}]
  %s7 = inlined_call_operand.vmem [shape: f32[64,64], index: 7, kind: input, shape index: {}]
  %s8 = inlined_call_operand.vmem [shape: f32[1,64], index: 8, kind: input, shape index: {}]
  %s9 = inlined_call_operand.hbm [shape: f32[2,8,64], index: 9, kind: output, shape index: {}]
  %s10 = sld [smem:[#allocation0]]
  $region69: #{tpu_custom_call.1} parent=0
    _
  %s12 = ssub.s32 1, %s10
  %s13 = scalar_select 0, %s12, %s10
  $region1: #{tpu_custom_call.1} parent=0
    #allocation2 [shape = 'u8[8192]{0}', space=vmem, size = 0x2000, scoped, tag = 'output window, operand 0']
    #allocation3 [shape = 's32[2]{0}', space=sflag, size = 0x8, scoped, tag = 'scoped memory for tpu_custom_call.1']
    %14 = vsyncpa [#allocation3], 0
    %s15 = scalar_lea.sflag [#allocation3], 1
    %16 = vsyncpa %s15, 0
    loop: start=0, step=1, limit=4
    $region2: #{tpu_custom_call.1} parent=1 // loop_pre_header
      _
    $region3: #{tpu_custom_call.1} parent=1 // loop_header
      %s18 = sphi 0, %s22
      %p19 = scmp.ge.s32.totalorder %s18, 4
      %s28 = sphi 0, %s30
      %s31 = sphi 0, %s28
      %s32 = sphi 0, %s31
      %s48 = sphi 0, %s32
      %s52 = sphi 0, %s52
      %s54 = sphi 0, %s52
      %s55 = sphi 0, %s54
      %s69 = sphi 0, %s55
      %s73 = sphi 0, %s73
      %s75 = sphi 0, %s73
      %s76 = sphi 0, %s75
      %s90 = sphi 0, %s76
      %s94 = sphi 0, %s94
      %s96 = sphi 0, %s94
      %s97 = sphi 0, %s96
      %s111 = sphi 0, %s97
      %s115 = sphi 0, %s115
      %s117 = sphi 0, %s115
      %s118 = sphi 0, %s117
      %s132 = sphi 0, %s118
      %s136 = sphi 0, %s136
      %s138 = sphi 0, %s136
      %s139 = sphi 0, %s138
      %s153 = sphi 0, %s139
      %s157 = sphi 0, %s157
      %s159 = sphi 0, %s157
      %s160 = sphi 0, %s159
      %s174 = sphi 0, %s160
      %s178 = sphi 0, %s178
      %s180 = sphi 0, %s178
      %s181 = sphi 0, %s180
      %s195 = sphi 0, %s181
      %s199 = sphi 0, %s199
      %s201 = sphi 0, %s199
      %s202 = sphi 0, %s201
      %s216 = sphi 0, %s202
      %s222 = sphi 0, %s224
      %s225 = sphi 0, %s222
      %s226 = sphi 0, %s225
      %s242 = sphi 0, %s226
    $region4: #{tpu_custom_call.1} parent=1 // loop_header_branch
      %21 = sbr.rel (%p19) target = $region8
    $region5: #{tpu_custom_call.1} parent=1 // loop_body
      %s23 = ssub.s32 %s18, 1
      %s24 = ssub.s32 %s18, 2
      %s25 = sadd.s32 %s18, 1
      %s26 = ssub.s32 %s18, %s25
      %p27 = scmp.eq.s32.totalorder %s26, 0
      %s29 = sadd.s32 %s28, 1
      %s30 = scalar_select %p27, %s28, %s29
      %p33 = pneg %p27
      %p34 = scmp.eq.s32.totalorder %s18, 1
      %p35 = por %p33, %p34
      %p36 = scmp.ne.s32.totalorder %s28, %s31
      %p37 = scmp.eq.s32.totalorder %s18, 0
      %p38 = por %p36, %p37
      %p39 = scmp.ne.s32.totalorder %s28, %s31
      %p40 = scmp.eq.s32.totalorder %s23, 1
      %p41 = por %p39, %p40
      %p42 = scmp.ne.s32.totalorder %s31, %s32
      %p43 = scmp.eq.s32.totalorder %s23, 0
      %p44 = por %p42, %p43
      %p45 = scmp.ne.s32.totalorder %s31, %s32
      %p46 = scmp.eq.s32.totalorder %s24, 1
      %p47 = por %p45, %p46
      %p49 = scmp.ne.s32.totalorder %s32, %s48
      %p50 = scmp.eq.s32.totalorder %s24, 0
      %p51 = por %p49, %p50
      %s53 = sadd.s32 %s52, 1
      %p56 = scmp.eq.s32.totalorder %s18, 1
      %p57 = scmp.ne.s32.totalorder %s52, %s54
      %p58 = scmp.eq.s32.totalorder %s18, 0
      %p59 = por %p57, %p58
      %p60 = scmp.ne.s32.totalorder %s52, %s54
      %p61 = scmp.eq.s32.totalorder %s23, 1
      %p62 = por %p60, %p61
      %p63 = scmp.ne.s32.totalorder %s54, %s55
      %p64 = scmp.eq.s32.totalorder %s23, 0
      %p65 = por %p63, %p64
      %p66 = scmp.ne.s32.totalorder %s54, %s55
      %p67 = scmp.eq.s32.totalorder %s24, 1
      %p68 = por %p66, %p67
      %p70 = scmp.ne.s32.totalorder %s55, %s69
      %p71 = scmp.eq.s32.totalorder %s24, 0
      %p72 = por %p70, %p71
      %s74 = sadd.s32 %s73, 1
      %p77 = scmp.eq.s32.totalorder %s18, 1
      %p78 = scmp.ne.s32.totalorder %s73, %s75
      %p79 = scmp.eq.s32.totalorder %s18, 0
      %p80 = por %p78, %p79
      %p81 = scmp.ne.s32.totalorder %s73, %s75
      %p82 = scmp.eq.s32.totalorder %s23, 1
      %p83 = por %p81, %p82
      %p84 = scmp.ne.s32.totalorder %s75, %s76
      %p85 = scmp.eq.s32.totalorder %s23, 0
      %p86 = por %p84, %p85
      %p87 = scmp.ne.s32.totalorder %s75, %s76
      %p88 = scmp.eq.s32.totalorder %s24, 1
      %p89 = por %p87, %p88
      %p91 = scmp.ne.s32.totalorder %s76, %s90
      %p92 = scmp.eq.s32.totalorder %s24, 0
      %p93 = por %p91, %p92
      %s95 = sadd.s32 %s94, 1
      %p98 = scmp.eq.s32.totalorder %s18, 1
      %p99 = scmp.ne.s32.totalorder %s94, %s96
      %p100 = scmp.eq.s32.totalorder %s18, 0
      %p101 = por %p99, %p100
      %p102 = scmp.ne.s32.totalorder %s94, %s96
      %p103 = scmp.eq.s32.totalorder %s23, 1
      %p104 = por %p102, %p103
      %p105 = scmp.ne.s32.totalorder %s96, %s97
      %p106 = scmp.eq.s32.totalorder %s23, 0
      %p107 = por %p105, %p106
      %p108 = scmp.ne.s32.totalorder %s96, %s97
      %p109 = scmp.eq.s32.totalorder %s24, 1
      %p110 = por %p108, %p109
      %p112 = scmp.ne.s32.totalorder %s97, %s111
      %p113 = scmp.eq.s32.totalorder %s24, 0
      %p114 = por %p112, %p113
      %s116 = sadd.s32 %s115, 1
      %p119 = scmp.eq.s32.totalorder %s18, 1
      %p120 = scmp.ne.s32.totalorder %s115, %s117
      %p121 = scmp.eq.s32.totalorder %s18, 0
      %p122 = por %p120, %p121
      %p123 = scmp.ne.s32.totalorder %s115, %s117
      %p124 = scmp.eq.s32.totalorder %s23, 1
      %p125 = por %p123, %p124
      %p126 = scmp.ne.s32.totalorder %s117, %s118
      %p127 = scmp.eq.s32.totalorder %s23, 0
      %p128 = por %p126, %p127
      %p129 = scmp.ne.s32.totalorder %s117, %s118
      %p130 = scmp.eq.s32.totalorder %s24, 1
      %p131 = por %p129, %p130
      %p133 = scmp.ne.s32.totalorder %s118, %s132
      %p134 = scmp.eq.s32.totalorder %s24, 0
      %p135 = por %p133, %p134
      %s137 = sadd.s32 %s136, 1
      %p140 = scmp.eq.s32.totalorder %s18, 1
      %p141 = scmp.ne.s32.totalorder %s136, %s138
      %p142 = scmp.eq.s32.totalorder %s18, 0
      %p143 = por %p141, %p142
      %p144 = scmp.ne.s32.totalorder %s136, %s138
      %p145 = scmp.eq.s32.totalorder %s23, 1
      %p146 = por %p144, %p145
      %p147 = scmp.ne.s32.totalorder %s138, %s139
      %p148 = scmp.eq.s32.totalorder %s23, 0
      %p149 = por %p147, %p148
      %p150 = scmp.ne.s32.totalorder %s138, %s139
      %p151 = scmp.eq.s32.totalorder %s24, 1
      %p152 = por %p150, %p151
      %p154 = scmp.ne.s32.totalorder %s139, %s153
      %p155 = scmp.eq.s32.totalorder %s24, 0
      %p156 = por %p154, %p155
      %s158 = sadd.s32 %s157, 1
      %p161 = scmp.eq.s32.totalorder %s18, 1
      %p162 = scmp.ne.s32.totalorder %s157, %s159
      %p163 = scmp.eq.s32.totalorder %s18, 0
      %p164 = por %p162, %p163
      %p165 = scmp.ne.s32.totalorder %s157, %s159
      %p166 = scmp.eq.s32.totalorder %s23, 1
      %p167 = por %p165, %p166
      %p168 = scmp.ne.s32.totalorder %s159, %s160
      %p169 = scmp.eq.s32.totalorder %s23, 0
      %p170 = por %p168, %p169
      %p171 = scmp.ne.s32.totalorder %s159, %s160
      %p172 = scmp.eq.s32.totalorder %s24, 1
      %p173 = por %p171, %p172
      %p175 = scmp.ne.s32.totalorder %s160, %s174
      %p176 = scmp.eq.s32.totalorder %s24, 0
      %p177 = por %p175, %p176
      %s179 = sadd.s32 %s178, 1
      %p182 = scmp.eq.s32.totalorder %s18, 1
      %p183 = scmp.ne.s32.totalorder %s178, %s180
      %p184 = scmp.eq.s32.totalorder %s18, 0
      %p185 = por %p183, %p184
      %p186 = scmp.ne.s32.totalorder %s178, %s180
      %p187 = scmp.eq.s32.totalorder %s23, 1
      %p188 = por %p186, %p187
      %p189 = scmp.ne.s32.totalorder %s180, %s181
      %p190 = scmp.eq.s32.totalorder %s23, 0
      %p191 = por %p189, %p190
      %p192 = scmp.ne.s32.totalorder %s180, %s181
      %p193 = scmp.eq.s32.totalorder %s24, 1
      %p194 = por %p192, %p193
      %p196 = scmp.ne.s32.totalorder %s181, %s195
      %p197 = scmp.eq.s32.totalorder %s24, 0
      %p198 = por %p196, %p197
      %s200 = sadd.s32 %s199, 1
      %p203 = scmp.eq.s32.totalorder %s18, 1
      %p204 = scmp.ne.s32.totalorder %s199, %s201
      %p205 = scmp.eq.s32.totalorder %s18, 0
      %p206 = por %p204, %p205
      %p207 = scmp.ne.s32.totalorder %s199, %s201
      %p208 = scmp.eq.s32.totalorder %s23, 1
      %p209 = por %p207, %p208
      %p210 = scmp.ne.s32.totalorder %s201, %s202
      %p211 = scmp.eq.s32.totalorder %s23, 0
      %p212 = por %p210, %p211
      %p213 = scmp.ne.s32.totalorder %s201, %s202
      %p214 = scmp.eq.s32.totalorder %s24, 1
      %p215 = por %p213, %p214
      %p217 = scmp.ne.s32.totalorder %s202, %s216
      %p218 = scmp.eq.s32.totalorder %s24, 0
      %p219 = por %p217, %p218
      %s220 = ssub.s32 %s18, %s25
      %p221 = scmp.eq.s32.totalorder %s220, 0
      %s223 = sadd.s32 %s222, 1
      %s224 = scalar_select %p221, %s222, %s223
      %p227 = pneg %p221
      %p228 = scmp.eq.s32.totalorder %s18, 1
      %p229 = por %p227, %p228
      %p230 = scmp.ne.s32.totalorder %s222, %s225
      %p231 = scmp.eq.s32.totalorder %s18, 0
      %p232 = por %p230, %p231
      %p233 = scmp.ne.s32.totalorder %s222, %s225
      %p234 = scmp.eq.s32.totalorder %s23, 1
      %p235 = por %p233, %p234
      %p236 = scmp.ne.s32.totalorder %s225, %s226
      %p237 = scmp.eq.s32.totalorder %s23, 0
      %p238 = por %p236, %p237
      %p239 = scmp.ne.s32.totalorder %s225, %s226
      %p240 = scmp.eq.s32.totalorder %s24, 1
      %p241 = por %p239, %p240
      %p243 = scmp.ne.s32.totalorder %s226, %s242
      %p244 = scmp.eq.s32.totalorder %s24, 0
      %p245 = por %p243, %p244
      %p246 = scmp.le.s32.totalorder 1, %s18
      %p247 = scmp.lt.s32.totalorder %s18, 3
      %p248 = pnand %p246, %p247
      %p249 = pneg %p248
      // Predicated region
      $region9: #{tpu_custom_call.1} parent=5 // pred_check
        _
      $region10: #{tpu_custom_call.1} parent=5 // pred_check_branch
        %251 = sbr.rel (%p248) target = $region12
      $region11: #{tpu_custom_call.1} parent=5 // pred_region
        %s252 = ssub.s32 %s18, 1
        // Predicated region
        $region13: #{tpu_custom_call.1} parent=11 // pred_check
          %p253 = pneg %p65
        $region14: #{tpu_custom_call.1} parent=11 // pred_check_branch
          %255 = sbr.rel (%p253) target = $region16
        $region15: #{tpu_custom_call.1} parent=11 // pred_region
          _
        $region16: #{tpu_custom_call.1} parent=11 // pred_fallthru
          _
        // Predicated region
        $region17: #{tpu_custom_call.1} parent=11 // pred_check
          %p256 = pneg %p86
        $region18: #{tpu_custom_call.1} parent=11 // pred_check_branch
          %258 = sbr.rel (%p256) target = $region20
        $region19: #{tpu_custom_call.1} parent=11 // pred_region
          _
        $region20: #{tpu_custom_call.1} parent=11 // pred_fallthru
          _
        // Predicated region
        $region21: #{tpu_custom_call.1} parent=11 // pred_check
          %p259 = pneg %p107
        $region22: #{tpu_custom_call.1} parent=11 // pred_check_branch
          %261 = sbr.rel (%p259) target = $region24
        $region23: #{tpu_custom_call.1} parent=11 // pred_region
          _
        $region24: #{tpu_custom_call.1} parent=11 // pred_fallthru
          _
        // Predicated region
        $region25: #{tpu_custom_call.1} parent=11 // pred_check
          %p262 = pneg %p128
        $region26: #{tpu_custom_call.1} parent=11 // pred_check_branch
          %264 = sbr.rel (%p262) target = $region28
        $region27: #{tpu_custom_call.1} parent=11 // pred_region
          _
        $region28: #{tpu_custom_call.1} parent=11 // pred_fallthru
          _
        // Predicated region
        $region29: #{tpu_custom_call.1} parent=11 // pred_check
          %p265 = pneg %p149
        $region30: #{tpu_custom_call.1} parent=11 // pred_check_branch
          %267 = sbr.rel (%p265) target = $region32
        $region31: #{tpu_custom_call.1} parent=11 // pred_region
          _
        $region32: #{tpu_custom_call.1} parent=11 // pred_fallthru
          _
        // Predicated region
        $region33: #{tpu_custom_call.1} parent=11 // pred_check
          %p268 = pneg %p170
        $region34: #{tpu_custom_call.1} parent=11 // pred_check_branch
          %270 = sbr.rel (%p268) target = $region36
        $region35: #{tpu_custom_call.1} parent=11 // pred_region
          _
        $region36: #{tpu_custom_call.1} parent=11 // pred_fallthru
          _
        // Predicated region
        $region37: #{tpu_custom_call.1} parent=11 // pred_check
          %p271 = pneg %p191
        $region38: #{tpu_custom_call.1} parent=11 // pred_check_branch
          %273 = sbr.rel (%p271) target = $region40
        $region39: #{tpu_custom_call.1} parent=11 // pred_region
          _
        $region40: #{tpu_custom_call.1} parent=11 // pred_fallthru
          _
        // Predicated region
        $region41: #{tpu_custom_call.1} parent=11 // pred_check
          %p274 = pneg %p212
        $region42: #{tpu_custom_call.1} parent=11 // pred_check_branch
          %276 = sbr.rel (%p274) target = $region44
        $region43: #{tpu_custom_call.1} parent=11 // pred_region
          _
        $region44: #{tpu_custom_call.1} parent=11 // pred_fallthru
          _
      $region12: #{tpu_custom_call.1} parent=5 // pred_fallthru
        _
      %p277 = scmp.lt.s32.totalorder %s18, 2
      // Predicated region
      $region45: #{tpu_custom_call.1} parent=5 // pred_check
        %p278 = pneg %p277
      $region46: #{tpu_custom_call.1} parent=5 // pred_check_branch
        %280 = sbr.rel (%p278) target = $region48
      $region47: #{tpu_custom_call.1} parent=5 // pred_region
        // Predicated region
        $region49: #{tpu_custom_call.1} parent=47 // pred_check
          %p281 = pneg %p38
        $region50: #{tpu_custom_call.1} parent=47 // pred_check_branch
          %283 = sbr.rel (%p281) target = $region52
        $region51: #{tpu_custom_call.1} parent=47 // pred_region
          %p284 = scmp.lt.s32.totalorder %s18, 1
          %s285 = scalar_select %p284, %s18, 1
          %s286 = smul.addr %s285, 8
          %s287 = scalar_lea.vmem %s0, %s286
        $region52: #{tpu_custom_call.1} parent=47 // pred_fallthru
          _
      $region48: #{tpu_custom_call.1} parent=5 // pred_fallthru
        _
      %p288 = scmp.le.s32.totalorder 1, %s18
      %p289 = scmp.lt.s32.totalorder %s18, 3
      %p290 = pnand %p288, %p289
      %p291 = pneg %p290
      // Predicated region
      $region53: #{tpu_custom_call.1} parent=5 // pred_check
        _
      $region54: #{tpu_custom_call.1} parent=5 // pred_check_branch
        %293 = sbr.rel (%p290) target = $region56
      $region55: #{tpu_custom_call.1} parent=5 // pred_region
        %s294 = ssub.s32 %s18, 1
        %p295 = scmp.lt.s32.totalorder %s23, 1
        %s296 = scalar_select %p295, %s23, 1
        %s297 = smul.addr %s296, 8
        %s298 = scalar_lea.vmem %s0, %s297
        %p299 = pneg %p44
        %p300 = pneg %p41
        %p301 = pneg %p65
        %p302 = pneg %p62
        %p303 = pneg %p86
        %p304 = pneg %p83
        %p305 = pneg %p107
        %p306 = pneg %p104
        %p307 = pneg %p128
        %p308 = pneg %p125
        %p309 = pneg %p149
        %p310 = pneg %p146
        %p311 = pneg %p170
        %p312 = pneg %p167
        %p313 = pneg %p191
        %p314 = pneg %p188
        %p315 = pneg %p212
        %p316 = pneg %p209
        %p317 = pneg %p238
        %p318 = pneg %p235
        %s319 = sand.u32 %s225, 1
        %s320 = scalar_lea.sflag [#allocation3], %s319
        %s321 = sand.u32 %s225, 1
        %s322 = smul.addr %s321, 8
        %s323 = scalar_lea.vmem [#allocation2], %s322
        %p324 = scmp.lt.s32.totalorder %s23, 1
        %s325 = scalar_select %p324, %s23, 1
        %s326 = smul.addr %s325, 8
        %s327 = scalar_lea.vmem %s0, %s326
        %v328 = vld [vmem:[%s327] sm:$0xff]
        %v329 = vld [vmem:[%s1] sm:$0xff]
        %v330 = vld [vmem:[%s1 + $0x8] sm:$0xff]
        %v331 = vld [vmem:[%s1 + $0x10] sm:$0xff]
        %v332 = vld [vmem:[%s1 + $0x18] sm:$0xff]
        %v333 = vld [vmem:[%s1 + $0x20] sm:$0xff]
        %v334 = vld [vmem:[%s1 + $0x28] sm:$0xff]
        %v335 = vld [vmem:[%s1 + $0x30] sm:$0xff]
        %v336 = vld [vmem:[%s1 + $0x38] sm:$0xff]
        %v337 = vld [vmem:[%s2] sm:$0x1]
        %v338 = vld [vmem:[%s3] sm:$0xff]
        %v339 = vld [vmem:[%s4] sm:$0x1]
        %v340 = vld [vmem:[%s5] sm:$0x1]
        %v341 = vld [vmem:[%s6] sm:$0x1]
        %v342 = vld [vmem:[%s7] sm:$0xff]
        %v343 = vld [vmem:[%s7 + $0x8] sm:$0xff]
        %v344 = vld [vmem:[%s7 + $0x10] sm:$0xff]
        %v345 = vld [vmem:[%s7 + $0x18] sm:$0xff]
        %v346 = vld [vmem:[%s7 + $0x20] sm:$0xff]
        %v347 = vld [vmem:[%s7 + $0x28] sm:$0xff]
        %v348 = vld [vmem:[%s7 + $0x30] sm:$0xff]
        %v349 = vld [vmem:[%s7 + $0x38] sm:$0xff]
        %v350 = vld [vmem:[%s8] sm:$0x1]
        %v352 = vperm.slane %v337, 0
        %vm354 = vcmask 523264
        %v356 = vsel %vm354, %v328, 0
        %358 = vmatpush.msra.mxu0 0.0
        %359 = vmatpush.msra.mxu0 0.0
        %360 = vmatpush.msra.mxu0 0.0
        %361 = vmatpush.msra.mxu0 0.0
        %362 = vmatpush.msra.mxu0 0.0
        %363 = vmatpush.msra.mxu0 0.0
        %364 = vmatpush.msra.mxu0 0.0
        %365 = vmatpush.msra.mxu0 0.0
        %366 = vmatpush.msra.mxu0 %v336
        %367 = vmatpush.msra.mxu0 %v335
        %368 = vmatpush.msra.mxu0 %v334
        %369 = vmatpush.msra.mxu0 %v333
        %370 = vmatpush.msra.mxu0 %v332
        %371 = vmatpush.msra.mxu0 %v331
        %372 = vmatpush.msra.mxu0 %v330
        %373 = vmatpush.msra.mxu0 %v329
        %374 = vmatmul.f32.gmra.mxu0 %v356
        %v375 = vpop.f32.mrf.mxu0
        %v376 = vadd.f32 %v352, %v375
        %377 = vdwg.mxu0
        %379 = vrot.lane.b32.xlu0 %v376, 120
        %v380 = vpop.permute.xlu0 %379
        %vm381 = vcmask 64512
        %v382 = vsel %vm381, %v376, 0
        %v384 = vsel %vm381, %v380, 0
        %386 = vmatpush.xpose.msra.mxu0 0.0
        %387 = vmatpush.xpose.msra.mxu0 0.0
        %388 = vmatpush.xpose.msra.mxu0 0.0
        %389 = vmatpush.xpose.msra.mxu0 0.0
        %390 = vmatpush.xpose.msra.mxu0 0.0
        %391 = vmatpush.xpose.msra.mxu0 0.0
        %392 = vmatpush.xpose.msra.mxu0 0.0
        %393 = vmatpush.xpose.msra.mxu0 0.0
        %394 = vmatpush.xpose.msra.mxu0 0.0
        %395 = vmatpush.xpose.msra.mxu0 0.0
        %396 = vmatpush.xpose.msra.mxu0 0.0
        %397 = vmatpush.xpose.msra.mxu0 0.0
        %398 = vmatpush.xpose.msra.mxu0 0.0
        %399 = vmatpush.xpose.msra.mxu0 0.0
        %400 = vmatpush.xpose.msra.mxu0 0.0
        %401 = vmatpush.xpose.msra.mxu0 %v384
        %402 = vmatmul.f32.gmra.mxu0 %v382
        %v403 = vpop.f32.mrf.mxu0
        %v404 = vadd.f32 0.0, %v403
        %405 = vdwg.mxu0
        %v406 = vmul.f32 %v404, 0.35355338
        %v407 = vsel %vm381, %v406, -inf
        %v408 = vrot.slane %v407, 4
        %v409 = vmax.f32 %v407, %v408
        %v410 = vrot.slane %v409, 2
        %v411 = vmax.f32 %v409, %v410
        %v412 = vrot.slane %v411, 1
        %v413 = vmax.f32 %v411, %v412
        %v414 = vsub.f32 %v406, %v413
        %v415 = vmul.f32 %v414, 1.442695
        %v416 = vpow.pop %v415
        %v417 = vsel %vm381, %v416, 0.0
        %v418 = vrot.slane %v417, 4
        %v419 = vadd.f32 %v417, %v418
        %v420 = vrot.slane %v419, 2
        %v421 = vadd.f32 %v419, %v420
        %v422 = vrot.slane %v421, 1
        %v423 = vadd.f32 %v421, %v422
        %v424 = vrcp.pop %v423
        %v425 = vmul.f32 %v416, %v424
        %426 = vrot.lane.b32.xlu0 %v376, 112
        %v427 = vpop.permute.xlu0 %426
        %v430 = vsel %vm381, %v425, 0
        %432 = vmatpush.msra.mxu0 0.0
        %433 = vmatpush.msra.mxu0 0.0
        %434 = vmatpush.msra.mxu0 0.0
        %435 = vmatpush.msra.mxu0 0.0
        %436 = vmatpush.msra.mxu0 0.0
        %437 = vmatpush.msra.mxu0 0.0
        %438 = vmatpush.msra.mxu0 0.0
        %439 = vmatpush.msra.mxu0 0.0
        %440 = vmatpush.msra.mxu0 0.0
        %441 = vmatpush.msra.mxu0 0.0
        %442 = vmatpush.msra.mxu0 0.0
        %443 = vmatpush.msra.mxu0 0.0
        %444 = vmatpush.msra.mxu0 0.0
        %445 = vmatpush.msra.mxu0 0.0
        %446 = vmatpush.msra.mxu0 0.0
        %447 = vmatpush.msra.mxu0 %v427
        %448 = vmatmul.f32.gmra.mxu0 %v430
        %v449 = vpop.f32.mrf.mxu0
        %v450 = vadd.f32 0.0, %v449
        %451 = vdwg.mxu0
        %v453 = vperm.slane %v339, 0
        %v456 = vsel %vm381, %v450, 0
        %458 = vmatpush.msra.mxu0 0.0
        %459 = vmatpush.msra.mxu0 0.0
        %460 = vmatpush.msra.mxu0 0.0
        %461 = vmatpush.msra.mxu0 0.0
        %462 = vmatpush.msra.mxu0 0.0
        %463 = vmatpush.msra.mxu0 0.0
        %464 = vmatpush.msra.mxu0 0.0
        %465 = vmatpush.msra.mxu0 0.0
        %466 = vmatpush.msra.mxu0 0.0
        %467 = vmatpush.msra.mxu0 0.0
        %468 = vmatpush.msra.mxu0 0.0
        %469 = vmatpush.msra.mxu0 0.0
        %470 = vmatpush.msra.mxu0 0.0
        %471 = vmatpush.msra.mxu0 0.0
        %472 = vmatpush.msra.mxu0 0.0
        %473 = vmatpush.msra.mxu0 %v338
        %474 = vmatmul.f32.gmra.mxu0 %v456
        %v475 = vpop.f32.mrf.mxu0
        %v476 = vadd.f32 %v453, %v475
        %477 = vdwg.mxu0
        %v478 = vadd.f32 %v476, %v328
        %v479 = vsel %vm354, %v478, 0.0
        %480 = vadd.xlane.f32.xlu0 %v479
        %v481 = vpop.xlane.xlu0 %480
        %v482 = vrcp.pop 64.0
        %v483 = vmul.f32 64.0, %v482
        %v484 = vsub.f32 1.0, %v483
        %v485 = vmul.f32 %v482, %v484
        %v486 = vadd.f32 %v482, %v485
        %vm487 = vweird.f32 %v482
        %v488 = vsel %vm487, %v482, %v486
        %v489 = vmul.f32 %v481, %v488
        %v490 = vsub.f32 %v478, %v489
        %v491 = vmul.f32 %v490, %v490
        %v492 = vsel %vm354, %v491, 0.0
        %493 = vadd.xlane.f32.xlu0 %v492
        %v494 = vpop.xlane.xlu0 %493
        %v495 = vmul.f32 %v494, %v488
        %v496 = vadd.f32 %v495, 1e-05
        %v497 = vrsqrt.pop %v496
        %v498 = vmul.f32 %v497, %v496
        %v499 = vmul.f32 %v498, %v497
        %v500 = vmul.f32 0.5, %v499
        %v501 = vsub.f32 1.5, %v500
        %v502 = vmul.f32 %v497, %v501
        %vm503 = vweird.f32 %v496
        %vm504 = vweird.f32 %v497
        %vm505 = vmor %vm503, %vm504
        %v506 = vsel %vm505, %v497, %v502
        %v507 = vmul.f32 %v490, %v506
        %v509 = vperm.slane %v340, 0
        %v511 = vmul.f32 %v507, %v509
        %v513 = vperm.slane %v341, 0
        %v515 = vadd.f32 %v511, %v513
        %v517 = vperm.slane %v350, 0
        %v520 = vsel %vm354, %v515, 0
        %522 = vmatpush.msra.mxu0 0.0
        %523 = vmatpush.msra.mxu0 0.0
        %524 = vmatpush.msra.mxu0 0.0
        %525 = vmatpush.msra.mxu0 0.0
        %526 = vmatpush.msra.mxu0 0.0
        %527 = vmatpush.msra.mxu0 0.0
        %528 = vmatpush.msra.mxu0 0.0
        %529 = vmatpush.msra.mxu0 0.0
        %530 = vmatpush.msra.mxu0 %v349
        %531 = vmatpush.msra.mxu0 %v348
        %532 = vmatpush.msra.mxu0 %v347
        %533 = vmatpush.msra.mxu0 %v346
        %534 = vmatpush.msra.mxu0 %v345
        %535 = vmatpush.msra.mxu0 %v344
        %536 = vmatpush.msra.mxu0 %v343
        %537 = vmatpush.msra.mxu0 %v342
        %538 = vmatmul.f32.gmra.mxu0 %v520
        %v539 = vpop.f32.mrf.mxu0
        %v540 = vadd.f32 %v517, %v539
        %541 = vdwg.mxu0
        %v542 = vadd.f32 %v515, %v540
        %v543 = vsel %vm354, %v542, 0.0
        %544 = vadd.xlane.f32.xlu0 %v543
        %v545 = vpop.xlane.xlu0 %544
        %v546 = vmul.f32 %v545, %v488
        %v547 = vsub.f32 %v542, %v546
        %v548 = vmul.f32 %v547, %v547
        %v549 = vsel %vm354, %v548, 0.0
        %550 = vadd.xlane.f32.xlu0 %v549
        %v551 = vpop.xlane.xlu0 %550
        %v552 = vmul.f32 %v551, %v488
        %v553 = vadd.f32 %v552, 1e-05
        %v554 = vrsqrt.pop %v553
        %v555 = vmul.f32 %v554, %v553
        %v556 = vmul.f32 %v555, %v554
        %v557 = vmul.f32 0.5, %v556
        %v558 = vsub.f32 1.5, %v557
        %v559 = vmul.f32 %v554, %v558
        %vm560 = vweird.f32 %v553
        %vm561 = vweird.f32 %v554
        %vm562 = vmor %vm560, %vm561
        %v563 = vsel %vm562, %v554, %v559
        %v564 = vmul.f32 %v547, %v563
        %v565 = vmul.f32 %v564, %v509
        %v566 = vadd.f32 %v565, %v513
        %v568 = vsel %vm354, %v566, 0
        %570 = vmatpush.msra.mxu0 0.0
        %571 = vmatpush.msra.mxu0 0.0
        %572 = vmatpush.msra.mxu0 0.0
        %573 = vmatpush.msra.mxu0 0.0
        %574 = vmatpush.msra.mxu0 0.0
        %575 = vmatpush.msra.mxu0 0.0
        %576 = vmatpush.msra.mxu0 0.0
        %577 = vmatpush.msra.mxu0 0.0
        %578 = vmatpush.msra.mxu0 %v336
        %579 = vmatpush.msra.mxu0 %v335
        %580 = vmatpush.msra.mxu0 %v334
        %581 = vmatpush.msra.mxu0 %v333
        %582 = vmatpush.msra.mxu0 %v332
        %583 = vmatpush.msra.mxu0 %v331
        %584 = vmatpush.msra.mxu0 %v330
        %585 = vmatpush.msra.mxu0 %v329
        %586 = vmatmul.f32.gmra.mxu0 %v568
        %v587 = vpop.f32.mrf.mxu0
        %v588 = vadd.f32 %v352, %v587
        %589 = vdwg.mxu0
        %591 = vrot.lane.b32.xlu0 %v588, 120
        %v592 = vpop.permute.xlu0 %591
        %v593 = vsel %vm381, %v588, 0
        %v595 = vsel %vm381, %v592, 0
        %597 = vmatpush.xpose.msra.mxu0 0.0
        %598 = vmatpush.xpose.msra.mxu0 0.0
        %599 = vmatpush.xpose.msra.mxu0 0.0
        %600 = vmatpush.xpose.msra.mxu0 0.0
        %601 = vmatpush.xpose.msra.mxu0 0.0
        %602 = vmatpush.xpose.msra.mxu0 0.0
        %603 = vmatpush.xpose.msra.mxu0 0.0
        %604 = vmatpush.xpose.msra.mxu0 0.0
        %605 = vmatpush.xpose.msra.mxu0 0.0
        %606 = vmatpush.xpose.msra.mxu0 0.0
        %607 = vmatpush.xpose.msra.mxu0 0.0
        %608 = vmatpush.xpose.msra.mxu0 0.0
        %609 = vmatpush.xpose.msra.mxu0 0.0
        %610 = vmatpush.xpose.msra.mxu0 0.0
        %611 = vmatpush.xpose.msra.mxu0 0.0
        %612 = vmatpush.xpose.msra.mxu0 %v595
        %613 = vmatmul.f32.gmra.mxu0 %v593
        %v614 = vpop.f32.mrf.mxu0
        %v615 = vadd.f32 0.0, %v614
        %616 = vdwg.mxu0
        %v617 = vmul.f32 %v615, 0.35355338
        %v618 = vsel %vm381, %v617, -inf
        %v619 = vrot.slane %v618, 4
        %v620 = vmax.f32 %v618, %v619
        %v621 = vrot.slane %v620, 2
        %v622 = vmax.f32 %v620, %v621
        %v623 = vrot.slane %v622, 1
        %v624 = vmax.f32 %v622, %v623
        %v625 = vsub.f32 %v617, %v624
        %v626 = vmul.f32 %v625, 1.442695
        %v627 = vpow.pop %v626
        %v628 = vsel %vm381, %v627, 0.0
        %v629 = vrot.slane %v628, 4
        %v630 = vadd.f32 %v628, %v629
        %v631 = vrot.slane %v630, 2
        %v632 = vadd.f32 %v630, %v631
        %v633 = vrot.slane %v632, 1
        %v634 = vadd.f32 %v632, %v633
        %v635 = vrcp.pop %v634
        %v636 = vmul.f32 %v627, %v635
        %637 = vrot.lane.b32.xlu0 %v588, 112
        %v638 = vpop.permute.xlu0 %637
        %v641 = vsel %vm381, %v636, 0
        %643 = vmatpush.msra.mxu0 0.0
        %644 = vmatpush.msra.mxu0 0.0
        %645 = vmatpush.msra.mxu0 0.0
        %646 = vmatpush.msra.mxu0 0.0
        %647 = vmatpush.msra.mxu0 0.0
        %648 = vmatpush.msra.mxu0 0.0
        %649 = vmatpush.msra.mxu0 0.0
        %650 = vmatpush.msra.mxu0 0.0
        %651 = vmatpush.msra.mxu0 0.0
        %652 = vmatpush.msra.mxu0 0.0
        %653 = vmatpush.msra.mxu0 0.0
        %654 = vmatpush.msra.mxu0 0.0
        %655 = vmatpush.msra.mxu0 0.0
        %656 = vmatpush.msra.mxu0 0.0
        %657 = vmatpush.msra.mxu0 0.0
        %658 = vmatpush.msra.mxu0 %v638
        %659 = vmatmul.f32.gmra.mxu0 %v641
        %v660 = vpop.f32.mrf.mxu0
        %v661 = vadd.f32 0.0, %v660
        %662 = vdwg.mxu0
        %v664 = vsel %vm381, %v661, 0
        %666 = vmatpush.msra.mxu0 0.0
        %667 = vmatpush.msra.mxu0 0.0
        %668 = vmatpush.msra.mxu0 0.0
        %669 = vmatpush.msra.mxu0 0.0
        %670 = vmatpush.msra.mxu0 0.0
        %671 = vmatpush.msra.mxu0 0.0
        %672 = vmatpush.msra.mxu0 0.0
        %673 = vmatpush.msra.mxu0 0.0
        %674 = vmatpush.msra.mxu0 0.0
        %675 = vmatpush.msra.mxu0 0.0
        %676 = vmatpush.msra.mxu0 0.0
        %677 = vmatpush.msra.mxu0 0.0
        %678 = vmatpush.msra.mxu0 0.0
        %679 = vmatpush.msra.mxu0 0.0
        %680 = vmatpush.msra.mxu0 0.0
        %681 = vmatpush.msra.mxu0 %v338
        %682 = vmatmul.f32.gmra.mxu0 %v664
        %v683 = vpop.f32.mrf.mxu0
        %v684 = vadd.f32 %v453, %v683
        %685 = vdwg.mxu0
        %v686 = vadd.f32 %v684, %v566
        %v687 = vsel %vm354, %v686, 0.0
        %688 = vadd.xlane.f32.xlu0 %v687
        %v689 = vpop.xlane.xlu0 %688
        %v690 = vmul.f32 %v689, %v488
        %v691 = vsub.f32 %v686, %v690
        %v692 = vmul.f32 %v691, %v691
        %v693 = vsel %vm354, %v692, 0.0
        %694 = vadd.xlane.f32.xlu0 %v693
        %v695 = vpop.xlane.xlu0 %694
        %v696 = vmul.f32 %v695, %v488
        %v697 = vadd.f32 %v696, 1e-05
        %v698 = vrsqrt.pop %v697
        %v699 = vmul.f32 %v698, %v697
        %v700 = vmul.f32 %v699, %v698
        %v701 = vmul.f32 0.5, %v700
        %v702 = vsub.f32 1.5, %v701
        %v703 = vmul.f32 %v698, %v702
        %vm704 = vweird.f32 %v697
        %vm705 = vweird.f32 %v698
        %vm706 = vmor %vm704, %vm705
        %v707 = vsel %vm706, %v698, %v703
        %v708 = vmul.f32 %v691, %v707
        %v709 = vmul.f32 %v708, %v509
        %v710 = vadd.f32 %v709, %v513
        %v712 = vsel %vm354, %v710, 0
        %714 = vmatpush.msra.mxu0 0.0
        %715 = vmatpush.msra.mxu0 0.0
        %716 = vmatpush.msra.mxu0 0.0
        %717 = vmatpush.msra.mxu0 0.0
        %718 = vmatpush.msra.mxu0 0.0
        %719 = vmatpush.msra.mxu0 0.0
        %720 = vmatpush.msra.mxu0 0.0
        %721 = vmatpush.msra.mxu0 0.0
        %722 = vmatpush.msra.mxu0 %v349
        %723 = vmatpush.msra.mxu0 %v348
        %724 = vmatpush.msra.mxu0 %v347
        %725 = vmatpush.msra.mxu0 %v346
        %726 = vmatpush.msra.mxu0 %v345
        %727 = vmatpush.msra.mxu0 %v344
        %728 = vmatpush.msra.mxu0 %v343
        %729 = vmatpush.msra.mxu0 %v342
        %730 = vmatmul.f32.gmra.mxu0 %v712
        %v731 = vpop.f32.mrf.mxu0
        %v732 = vadd.f32 %v517, %v731
        %733 = vdwg.mxu0
        %v734 = vadd.f32 %v710, %v732
        %v735 = vsel %vm354, %v734, 0.0
        %736 = vadd.xlane.f32.xlu0 %v735
        %v737 = vpop.xlane.xlu0 %736
        %v738 = vmul.f32 %v737, %v488
        %v739 = vsub.f32 %v734, %v738
        %v740 = vmul.f32 %v739, %v739
        %v741 = vsel %vm354, %v740, 0.0
        %742 = vadd.xlane.f32.xlu0 %v741
        %v743 = vpop.xlane.xlu0 %742
        %v744 = vmul.f32 %v743, %v488
        %v745 = vadd.f32 %v744, 1e-05
        %v746 = vrsqrt.pop %v745
        %v747 = vmul.f32 %v746, %v745
        %v748 = vmul.f32 %v747, %v746
        %v749 = vmul.f32 0.5, %v748
        %v750 = vsub.f32 1.5, %v749
        %v751 = vmul.f32 %v746, %v750
        %vm752 = vweird.f32 %v745
        %vm753 = vweird.f32 %v746
        %vm754 = vmor %vm752, %vm753
        %v755 = vsel %vm754, %v746, %v751
        %v756 = vmul.f32 %v739, %v755
        %v757 = vmul.f32 %v756, %v509
        %v758 = vadd.f32 %v757, %v513
        %v760 = vsel %vm354, %v758, 0
        %762 = vmatpush.msra.mxu0 0.0
        %763 = vmatpush.msra.mxu0 0.0
        %764 = vmatpush.msra.mxu0 0.0
        %765 = vmatpush.msra.mxu0 0.0
        %766 = vmatpush.msra.mxu0 0.0
        %767 = vmatpush.msra.mxu0 0.0
        %768 = vmatpush.msra.mxu0 0.0
        %769 = vmatpush.msra.mxu0 0.0
        %770 = vmatpush.msra.mxu0 %v336
        %771 = vmatpush.msra.mxu0 %v335
        %772 = vmatpush.msra.mxu0 %v334
        %773 = vmatpush.msra.mxu0 %v333
        %774 = vmatpush.msra.mxu0 %v332
        %775 = vmatpush.msra.mxu0 %v331
        %776 = vmatpush.msra.mxu0 %v330
        %777 = vmatpush.msra.mxu0 %v329
        %778 = vmatmul.f32.gmra.mxu0 %v760
        %v779 = vpop.f32.mrf.mxu0
        %v780 = vadd.f32 %v352, %v779
        %781 = vdwg.mxu0
        %783 = vrot.lane.b32.xlu0 %v780, 120
        %v784 = vpop.permute.xlu0 %783
        %v785 = vsel %vm381, %v780, 0
        %v787 = vsel %vm381, %v784, 0
        %789 = vmatpush.xpose.msra.mxu0 0.0
        %790 = vmatpush.xpose.msra.mxu0 0.0
        %791 = vmatpush.xpose.msra.mxu0 0.0
        %792 = vmatpush.xpose.msra.mxu0 0.0
        %793 = vmatpush.xpose.msra.mxu0 0.0
        %794 = vmatpush.xpose.msra.mxu0 0.0
        %795 = vmatpush.xpose.msra.mxu0 0.0
        %796 = vmatpush.xpose.msra.mxu0 0.0
        %797 = vmatpush.xpose.msra.mxu0 0.0
        %798 = vmatpush.xpose.msra.mxu0 0.0
        %799 = vmatpush.xpose.msra.mxu0 0.0
        %800 = vmatpush.xpose.msra.mxu0 0.0
        %801 = vmatpush.xpose.msra.mxu0 0.0
        %802 = vmatpush.xpose.msra.mxu0 0.0
        %803 = vmatpush.xpose.msra.mxu0 0.0
        %804 = vmatpush.xpose.msra.mxu0 %v787
        %805 = vmatmul.f32.gmra.mxu0 %v785
        %v806 = vpop.f32.mrf.mxu0
        %v807 = vadd.f32 0.0, %v806
        %808 = vdwg.mxu0
        %v809 = vmul.f32 %v807, 0.35355338
        %v810 = vsel %vm381, %v809, -inf
        %v811 = vrot.slane %v810, 4
        %v812 = vmax.f32 %v810, %v811
        %v813 = vrot.slane %v812, 2
        %v814 = vmax.f32 %v812, %v813
        %v815 = vrot.slane %v814, 1
        %v816 = vmax.f32 %v814, %v815
        %v817 = vsub.f32 %v809, %v816
        %v818 = vmul.f32 %v817, 1.442695
        %v819 = vpow.pop %v818
        %v820 = vsel %vm381, %v819, 0.0
        %v821 = vrot.slane %v820, 4
        %v822 = vadd.f32 %v820, %v821
        %v823 = vrot.slane %v822, 2
        %v824 = vadd.f32 %v822, %v823
        %v825 = vrot.slane %v824, 1
        %v826 = vadd.f32 %v824, %v825
        %v827 = vrcp.pop %v826
        %v828 = vmul.f32 %v819, %v827
        %829 = vrot.lane.b32.xlu0 %v780, 112
        %v830 = vpop.permute.xlu0 %829
        %v833 = vsel %vm381, %v828, 0
        %835 = vmatpush.msra.mxu0 0.0
        %836 = vmatpush.msra.mxu0 0.0
        %837 = vmatpush.msra.mxu0 0.0
        %838 = vmatpush.msra.mxu0 0.0
        %839 = vmatpush.msra.mxu0 0.0
        %840 = vmatpush.msra.mxu0 0.0
        %841 = vmatpush.msra.mxu0 0.0
        %842 = vmatpush.msra.mxu0 0.0
        %843 = vmatpush.msra.mxu0 0.0
        %844 = vmatpush.msra.mxu0 0.0
        %845 = vmatpush.msra.mxu0 0.0
        %846 = vmatpush.msra.mxu0 0.0
        %847 = vmatpush.msra.mxu0 0.0
        %848 = vmatpush.msra.mxu0 0.0
        %849 = vmatpush.msra.mxu0 0.0
        %850 = vmatpush.msra.mxu0 %v830
        %851 = vmatmul.f32.gmra.mxu0 %v833
        %v852 = vpop.f32.mrf.mxu0
        %v853 = vadd.f32 0.0, %v852
        %854 = vdwg.mxu0
        %v856 = vsel %vm381, %v853, 0
        %858 = vmatpush.msra.mxu0 0.0
        %859 = vmatpush.msra.mxu0 0.0
        %860 = vmatpush.msra.mxu0 0.0
        %861 = vmatpush.msra.mxu0 0.0
        %862 = vmatpush.msra.mxu0 0.0
        %863 = vmatpush.msra.mxu0 0.0
        %864 = vmatpush.msra.mxu0 0.0
        %865 = vmatpush.msra.mxu0 0.0
        %866 = vmatpush.msra.mxu0 0.0
        %867 = vmatpush.msra.mxu0 0.0
        %868 = vmatpush.msra.mxu0 0.0
        %869 = vmatpush.msra.mxu0 0.0
        %870 = vmatpush.msra.mxu0 0.0
        %871 = vmatpush.msra.mxu0 0.0
        %872 = vmatpush.msra.mxu0 0.0
        %873 = vmatpush.msra.mxu0 %v338
        %874 = vmatmul.f32.gmra.mxu0 %v856
        %v875 = vpop.f32.mrf.mxu0
        %v876 = vadd.f32 %v453, %v875
        %877 = vdwg.mxu0
        %v878 = vadd.f32 %v876, %v758
        %v879 = vsel %vm354, %v878, 0.0
        %880 = vadd.xlane.f32.xlu0 %v879
        %v881 = vpop.xlane.xlu0 %880
        %v882 = vmul.f32 %v881, %v488
        %v883 = vsub.f32 %v878, %v882
        %v884 = vmul.f32 %v883, %v883
        %v885 = vsel %vm354, %v884, 0.0
        %886 = vadd.xlane.f32.xlu0 %v885
        %v887 = vpop.xlane.xlu0 %886
        %v888 = vmul.f32 %v887, %v488
        %v889 = vadd.f32 %v888, 1e-05
        %v890 = vrsqrt.pop %v889
        %v891 = vmul.f32 %v890, %v889
        %v892 = vmul.f32 %v891, %v890
        %v893 = vmul.f32 0.5, %v892
        %v894 = vsub.f32 1.5, %v893
        %v895 = vmul.f32 %v890, %v894
        %vm896 = vweird.f32 %v889
        %vm897 = vweird.f32 %v890
        %vm898 = vmor %vm896, %vm897
        %v899 = vsel %vm898, %v890, %v895
        %v900 = vmul.f32 %v883, %v899
        %v901 = vmul.f32 %v900, %v509
        %v902 = vadd.f32 %v901, %v513
        %v904 = vsel %vm354, %v902, 0
        %906 = vmatpush.msra.mxu0 0.0
        %907 = vmatpush.msra.mxu0 0.0
        %908 = vmatpush.msra.mxu0 0.0
        %909 = vmatpush.msra.mxu0 0.0
        %910 = vmatpush.msra.mxu0 0.0
        %911 = vmatpush.msra.mxu0 0.0
        %912 = vmatpush.msra.mxu0 0.0
        %913 = vmatpush.msra.mxu0 0.0
        %914 = vmatpush.msra.mxu0 %v349
        %915 = vmatpush.msra.mxu0 %v348
        %916 = vmatpush.msra.mxu0 %v347
        %917 = vmatpush.msra.mxu0 %v346
        %918 = vmatpush.msra.mxu0 %v345
        %919 = vmatpush.msra.mxu0 %v344
        %920 = vmatpush.msra.mxu0 %v343
        %921 = vmatpush.msra.mxu0 %v342
        %922 = vmatmul.f32.gmra.mxu0 %v904
        %v923 = vpop.f32.mrf.mxu0
        %v924 = vadd.f32 %v517, %v923
        %925 = vdwg.mxu0
        %v926 = vadd.f32 %v902, %v924
        %v927 = vsel %vm354, %v926, 0.0
        %928 = vadd.xlane.f32.xlu0 %v927
        %v929 = vpop.xlane.xlu0 %928
        %v930 = vmul.f32 %v929, %v488
        %v931 = vsub.f32 %v926, %v930
        %v932 = vmul.f32 %v931, %v931
        %v933 = vsel %vm354, %v932, 0.0
        %934 = vadd.xlane.f32.xlu0 %v933
        %v935 = vpop.xlane.xlu0 %934
        %v936 = vmul.f32 %v935, %v488
        %v937 = vadd.f32 %v936, 1e-05
        %v938 = vrsqrt.pop %v937
        %v939 = vmul.f32 %v938, %v937
        %v940 = vmul.f32 %v939, %v938
        %v941 = vmul.f32 0.5, %v940
        %v942 = vsub.f32 1.5, %v941
        %v943 = vmul.f32 %v938, %v942
        %vm944 = vweird.f32 %v937
        %vm945 = vweird.f32 %v938
        %vm946 = vmor %vm944, %vm945
        %v947 = vsel %vm946, %v938, %v943
        %v948 = vmul.f32 %v931, %v947
        %v949 = vmul.f32 %v948, %v509
        %v950 = vadd.f32 %v949, %v513
        %v952 = vsel %vm354, %v950, 0
        %954 = vmatpush.msra.mxu0 0.0
        %955 = vmatpush.msra.mxu0 0.0
        %956 = vmatpush.msra.mxu0 0.0
        %957 = vmatpush.msra.mxu0 0.0
        %958 = vmatpush.msra.mxu0 0.0
        %959 = vmatpush.msra.mxu0 0.0
        %960 = vmatpush.msra.mxu0 0.0
        %961 = vmatpush.msra.mxu0 0.0
        %962 = vmatpush.msra.mxu0 %v336
        %963 = vmatpush.msra.mxu0 %v335
        %964 = vmatpush.msra.mxu0 %v334
        %965 = vmatpush.msra.mxu0 %v333
        %966 = vmatpush.msra.mxu0 %v332
        %967 = vmatpush.msra.mxu0 %v331
        %968 = vmatpush.msra.mxu0 %v330
        %969 = vmatpush.msra.mxu0 %v329
        %970 = vmatmul.f32.gmra.mxu0 %v952
        %v971 = vpop.f32.mrf.mxu0
        %v972 = vadd.f32 %v352, %v971
        %973 = vdwg.mxu0
        %975 = vrot.lane.b32.xlu0 %v972, 120
        %v976 = vpop.permute.xlu0 %975
        %v977 = vsel %vm381, %v972, 0
        %v979 = vsel %vm381, %v976, 0
        %981 = vmatpush.xpose.msra.mxu0 0.0
        %982 = vmatpush.xpose.msra.mxu0 0.0
        %983 = vmatpush.xpose.msra.mxu0 0.0
        %984 = vmatpush.xpose.msra.mxu0 0.0
        %985 = vmatpush.xpose.msra.mxu0 0.0
        %986 = vmatpush.xpose.msra.mxu0 0.0
        %987 = vmatpush.xpose.msra.mxu0 0.0
        %988 = vmatpush.xpose.msra.mxu0 0.0
        %989 = vmatpush.xpose.msra.mxu0 0.0
        %990 = vmatpush.xpose.msra.mxu0 0.0
        %991 = vmatpush.xpose.msra.mxu0 0.0
        %992 = vmatpush.xpose.msra.mxu0 0.0
        %993 = vmatpush.xpose.msra.mxu0 0.0
        %994 = vmatpush.xpose.msra.mxu0 0.0
        %995 = vmatpush.xpose.msra.mxu0 0.0
        %996 = vmatpush.xpose.msra.mxu0 %v979
        %997 = vmatmul.f32.gmra.mxu0 %v977
        %v998 = vpop.f32.mrf.mxu0
        %v999 = vadd.f32 0.0, %v998
        %1000 = vdwg.mxu0
        %v1001 = vmul.f32 %v999, 0.35355338
        %v1002 = vsel %vm381, %v1001, -inf
        %v1003 = vrot.slane %v1002, 4
        %v1004 = vmax.f32 %v1002, %v1003
        %v1005 = vrot.slane %v1004, 2
        %v1006 = vmax.f32 %v1004, %v1005
        %v1007 = vrot.slane %v1006, 1
        %v1008 = vmax.f32 %v1006, %v1007
        %v1009 = vsub.f32 %v1001, %v1008
        %v1010 = vmul.f32 %v1009, 1.442695
        %v1011 = vpow.pop %v1010
        %v1012 = vsel %vm381, %v1011, 0.0
        %v1013 = vrot.slane %v1012, 4
        %v1014 = vadd.f32 %v1012, %v1013
        %v1015 = vrot.slane %v1014, 2
        %v1016 = vadd.f32 %v1014, %v1015
        %v1017 = vrot.slane %v1016, 1
        %v1018 = vadd.f32 %v1016, %v1017
        %v1019 = vrcp.pop %v1018
        %v1020 = vmul.f32 %v1011, %v1019
        %1021 = vrot.lane.b32.xlu0 %v972, 112
        %v1022 = vpop.permute.xlu0 %1021
        %v1025 = vsel %vm381, %v1020, 0
        %1027 = vmatpush.msra.mxu0 0.0
        %1028 = vmatpush.msra.mxu0 0.0
        %1029 = vmatpush.msra.mxu0 0.0
        %1030 = vmatpush.msra.mxu0 0.0
        %1031 = vmatpush.msra.mxu0 0.0
        %1032 = vmatpush.msra.mxu0 0.0
        %1033 = vmatpush.msra.mxu0 0.0
        %1034 = vmatpush.msra.mxu0 0.0
        %1035 = vmatpush.msra.mxu0 0.0
        %1036 = vmatpush.msra.mxu0 0.0
        %1037 = vmatpush.msra.mxu0 0.0
        %1038 = vmatpush.msra.mxu0 0.0
        %1039 = vmatpush.msra.mxu0 0.0
        %1040 = vmatpush.msra.mxu0 0.0
        %1041 = vmatpush.msra.mxu0 0.0
        %1042 = vmatpush.msra.mxu0 %v1022
        %1043 = vmatmul.f32.gmra.mxu0 %v1025
        %v1044 = vpop.f32.mrf.mxu0
        %v1045 = vadd.f32 0.0, %v1044
        %1046 = vdwg.mxu0
        %v1048 = vsel %vm381, %v1045, 0
        %1050 = vmatpush.msra.mxu0 0.0
        %1051 = vmatpush.msra.mxu0 0.0
        %1052 = vmatpush.msra.mxu0 0.0
        %1053 = vmatpush.msra.mxu0 0.0
        %1054 = vmatpush.msra.mxu0 0.0
        %1055 = vmatpush.msra.mxu0 0.0
        %1056 = vmatpush.msra.mxu0 0.0
        %1057 = vmatpush.msra.mxu0 0.0
        %1058 = vmatpush.msra.mxu0 0.0
        %1059 = vmatpush.msra.mxu0 0.0
        %1060 = vmatpush.msra.mxu0 0.0
        %1061 = vmatpush.msra.mxu0 0.0
        %1062 = vmatpush.msra.mxu0 0.0
        %1063 = vmatpush.msra.mxu0 0.0
        %1064 = vmatpush.msra.mxu0 0.0
        %1065 = vmatpush.msra.mxu0 %v338
        %1066 = vmatmul.f32.gmra.mxu0 %v1048
        %v1067 = vpop.f32.mrf.mxu0
        %v1068 = vadd.f32 %v453, %v1067
        %1069 = vdwg.mxu0
        %v1070 = vadd.f32 %v1068, %v950
        %v1071 = vsel %vm354, %v1070, 0.0
        %1072 = vadd.xlane.f32.xlu0 %v1071
        %v1073 = vpop.xlane.xlu0 %1072
        %v1074 = vmul.f32 %v1073, %v488
        %v1075 = vsub.f32 %v1070, %v1074
        %v1076 = vmul.f32 %v1075, %v1075
        %v1077 = vsel %vm354, %v1076, 0.0
        %1078 = vadd.xlane.f32.xlu0 %v1077
        %v1079 = vpop.xlane.xlu0 %1078
        %v1080 = vmul.f32 %v1079, %v488
        %v1081 = vadd.f32 %v1080, 1e-05
        %v1082 = vrsqrt.pop %v1081
        %v1083 = vmul.f32 %v1082, %v1081
        %v1084 = vmul.f32 %v1083, %v1082
        %v1085 = vmul.f32 0.5, %v1084
        %v1086 = vsub.f32 1.5, %v1085
        %v1087 = vmul.f32 %v1082, %v1086
        %vm1088 = vweird.f32 %v1081
        %vm1089 = vweird.f32 %v1082
        %vm1090 = vmor %vm1088, %vm1089
        %v1091 = vsel %vm1090, %v1082, %v1087
        %v1092 = vmul.f32 %v1075, %v1091
        %v1093 = vmul.f32 %v1092, %v509
        %v1094 = vadd.f32 %v1093, %v513
        %v1096 = vsel %vm354, %v1094, 0
        %1098 = vmatpush.msra.mxu0 0.0
        %1099 = vmatpush.msra.mxu0 0.0
        %1100 = vmatpush.msra.mxu0 0.0
        %1101 = vmatpush.msra.mxu0 0.0
        %1102 = vmatpush.msra.mxu0 0.0
        %1103 = vmatpush.msra.mxu0 0.0
        %1104 = vmatpush.msra.mxu0 0.0
        %1105 = vmatpush.msra.mxu0 0.0
        %1106 = vmatpush.msra.mxu0 %v349
        %1107 = vmatpush.msra.mxu0 %v348
        %1108 = vmatpush.msra.mxu0 %v347
        %1109 = vmatpush.msra.mxu0 %v346
        %1110 = vmatpush.msra.mxu0 %v345
        %1111 = vmatpush.msra.mxu0 %v344
        %1112 = vmatpush.msra.mxu0 %v343
        %1113 = vmatpush.msra.mxu0 %v342
        %1114 = vmatmul.f32.gmra.mxu0 %v1096
        %v1115 = vpop.f32.mrf.mxu0
        %v1116 = vadd.f32 %v517, %v1115
        %1117 = vdwg.mxu0
        %v1118 = vadd.f32 %v1094, %v1116
        %v1119 = vsel %vm354, %v1118, 0.0
        %1120 = vadd.xlane.f32.xlu0 %v1119
        %v1121 = vpop.xlane.xlu0 %1120
        %v1122 = vmul.f32 %v1121, %v488
        %v1123 = vsub.f32 %v1118, %v1122
        %v1124 = vmul.f32 %v1123, %v1123
        %v1125 = vsel %vm354, %v1124, 0.0
        %1126 = vadd.xlane.f32.xlu0 %v1125
        %v1127 = vpop.xlane.xlu0 %1126
        %v1128 = vmul.f32 %v1127, %v488
        %v1129 = vadd.f32 %v1128, 1e-05
        %v1130 = vrsqrt.pop %v1129
        %v1131 = vmul.f32 %v1130, %v1129
        %v1132 = vmul.f32 %v1131, %v1130
        %v1133 = vmul.f32 0.5, %v1132
        %v1134 = vsub.f32 1.5, %v1133
        %v1135 = vmul.f32 %v1130, %v1134
        %vm1136 = vweird.f32 %v1129
        %vm1137 = vweird.f32 %v1130
        %vm1138 = vmor %vm1136, %vm1137
        %v1139 = vsel %vm1138, %v1130, %v1135
        %v1140 = vmul.f32 %v1123, %v1139
        %v1141 = vmul.f32 %v1140, %v509
        %v1142 = vadd.f32 %v1141, %v513
        %1143 = vst.msk [vmem:[%s323] sm:$0xff] %vm354, %v1142
        %s1144 = sand.u32 %s225, 1
        %s1145 = scalar_lea.sflag [#allocation3], %s1144
        %s1146 = sand.u32 %s225, 1
        %s1147 = smul.addr %s1146, 8
        %s1148 = scalar_lea.vmem [#allocation2], %s1147
        // Predicated region
        $region57: #{tpu_custom_call.1} parent=55 // pred_check
          %p1149 = pneg %p235
        $region58: #{tpu_custom_call.1} parent=55 // pred_check_branch
          %1151 = sbr.rel (%p1149) target = $region60
        $region59: #{tpu_custom_call.1} parent=55 // pred_region
          %1153 = vsyncadd %s1145, 0
          %s1154 = smul.addr %s23, 8
          %s1155 = scalar_lea.hbm %s9, %s1154
          %s1157 = sshll.u32 %s1148, 4
          %s1158 = int_to_ptr.vmem [resolvable:$true] %s1157
          %s1159 = sshll.u32 %s1155, 4
          %s1160 = int_to_ptr.hbm [resolvable:$true] %s1159
          %1162 = dma.vmem_to_hbm [thread:$0]  %s1158, 128, %s1160, %s1145
        $region60: #{tpu_custom_call.1} parent=55 // pred_fallthru
          _
      $region56: #{tpu_custom_call.1} parent=5 // pred_fallthru
        _
      %p1163 = scmp.le.s32.totalorder 2, %s18
      // Predicated region
      $region61: #{tpu_custom_call.1} parent=5 // pred_check
        %p1164 = pneg %p1163
      $region62: #{tpu_custom_call.1} parent=5 // pred_check_branch
        %1166 = sbr.rel (%p1164) target = $region64
      $region63: #{tpu_custom_call.1} parent=5 // pred_region
        %s1167 = ssub.s32 %s18, 2
        // Predicated region
        $region65: #{tpu_custom_call.1} parent=63 // pred_check
          %p1168 = pneg %p241
        $region66: #{tpu_custom_call.1} parent=63 // pred_check_branch
          %1170 = sbr.rel (%p1168) target = $region68
        $region67: #{tpu_custom_call.1} parent=63 // pred_region
          %s1171 = sand.u32 %s226, 1
          %s1172 = scalar_lea.sflag [#allocation3], %s1171
          %s1173 = sand.u32 %s226, 1
          %s1174 = smul.addr %s1173, 8
          %s1175 = scalar_lea.vmem [#allocation2], %s1174
          %1177 = dma.done %s1172, 128
        $region68: #{tpu_custom_call.1} parent=63 // pred_fallthru
          _
      $region64: #{tpu_custom_call.1} parent=5 // pred_fallthru
        _
    $region6: #{tpu_custom_call.1} parent=1 // loop_footer
      %s22 = sadd.s32 1, %s18
    $region7: #{tpu_custom_call.1} parent=1 // loop_footer_branch
      %17 = sbr.rel target = $region3
    $region8: #{tpu_custom_call.1} parent=1 // loop_exit
      _
    %1178 = vsyncpa [#allocation3], 1
    %s1179 = scalar_lea.sflag [#allocation3], 1
    %1180 = vsyncpa %s1179, 1

</llo_original>
